<compile_context>
chip_gen: v5e
topology: v5e:2x2
jax: 0.10.0
libtpu: 0.0.40
codegen_flags: <defaults>
</compile_context>

<pallas_src>
import math
import jax
import jax.numpy as jnp
from jax.experimental import pallas as pl
from jax.experimental.pallas import tpu as pltpu


def _round_up(x, m):
    return ((x + m - 1) // m) * m


def _leaky_relu(h, slope=0.01):
    # F.leaky_relu default negative_slope = 0.01
    return jnp.where(h > 0, h, slope * h)


# --------------------------------------------------------------------------
# Kernel
# --------------------------------------------------------------------------
def actor_kernel(x_ref, w1_ref, ws_ref, b_ref, wmu_ref, bmu_ref, out_ref):
    """Fused 4-layer MLP on one batch tile.

    x_ref  : [tile, D_in] f32   (cast to bf16 in-kernel; no wrapper cast)
    w1_ref : [D_in, H]    bf16  (fc1 weight, H = padded hidden width = 128)
    ws_ref : [2, H, H]    bf16  (fc2, fc3 weights, zero-padded)
    b_ref  : [3, H]       f32   (fc1, fc2, fc3 biases, zero-padded)
    wmu_ref: [H, NP]      bf16  (mu weight; n_actions zero-padded to NP lanes)
    bmu_ref: [1, NP]      f32
    out_ref: [tile, NP]   f32   (sigmoid; real actions are [:, :n_actions])
    """
    # layer 1 (in-kernel f32 -> bf16 cast rides a free VPU slot)
    x = x_ref[...].astype(jnp.bfloat16)
    h = jnp.dot(x, w1_ref[...], preferred_element_type=jnp.float32)
    h = _leaky_relu(h + b_ref[0:1, :])
    # layer 2
    h = jnp.dot(h.astype(jnp.bfloat16), ws_ref[0], preferred_element_type=jnp.float32)
    h = _leaky_relu(h + b_ref[1:2, :])
    # layer 3
    h = jnp.dot(h.astype(jnp.bfloat16), ws_ref[1], preferred_element_type=jnp.float32)
    h = _leaky_relu(h + b_ref[2:3, :])
    # mu layer computed straight into the narrow output width; sigmoid via
    # exp on the EUP + approximate reciprocal (keeps the VALU divide-free).
    logits = jnp.dot(h.astype(jnp.bfloat16), wmu_ref[...],
                     preferred_element_type=jnp.float32)
    logits = logits + bmu_ref[...]
    out_ref[...] = pl.reciprocal(1.0 + jnp.exp(-logits), approx=True)


# --------------------------------------------------------------------------
# Parameter packing
# --------------------------------------------------------------------------
def pack_params(p, hidden_pad=None, out_pad=8):
    """Pad hidden dims to a lane-dense width (multiple of 128), keep the mu
    output narrow (n_actions padded to `out_pad` lanes), cast weights to bf16,
    and stack same-shaped weights/biases to minimize operand count."""
    w1, b1 = p["w1"], p["b1"]
    w2, b2 = p["w2"], p["b2"]
    w3, b3 = p["w3"], p["b3"]
    wmu, bmu = p["wmu"], p["bmu"]
    d_in = w1.shape[0]
    n_actions = wmu.shape[1]
    H = hidden_pad or _round_up(max(w1.shape[1], w2.shape[1], w3.shape[1], wmu.shape[0]), 128)
    NP = max(out_pad, n_actions)

    def pad_sq(w):
        return jnp.zeros((H, H), jnp.float32).at[: w.shape[0], : w.shape[1]].set(w)

    def pad_vec(b, width):
        # Robust to both (out,) and (1, out) bias shapes.
        b = jnp.asarray(b, jnp.float32).reshape(-1)
        return jnp.zeros((width,), jnp.float32).at[: b.shape[0]].set(b)

    w1p = jnp.zeros((d_in, H), jnp.float32).at[:, : w1.shape[1]].set(w1)
    wmup = jnp.zeros((H, NP), jnp.float32).at[: wmu.shape[0], : n_actions].set(wmu)
    return {
        "w1": w1p.astype(jnp.bfloat16),
        "ws": jnp.stack([pad_sq(w2), pad_sq(w3)]).astype(jnp.bfloat16),
        "b": jnp.stack([pad_vec(b1, H), pad_vec(b2, H), pad_vec(b3, H)]),   # f32 [3, H]
        "wmu": wmup.astype(jnp.bfloat16),                                   # bf16 [H, NP]
        "bmu": pad_vec(bmu, NP).reshape(1, NP),                             # f32 [1, NP]
        "n_actions": n_actions,
        "hidden_pad": H,
        "out_pad": NP,
        "d_in": d_in,
    }


# --------------------------------------------------------------------------
# Tiling / wrapper
# --------------------------------------------------------------------------
_SINGLE_TILE_CAP = 2048  # per-tile working set at 2048 rows is still only ~3-4 MB


def _num_tensorcores():
    """Best-effort TensorCores visible to one Mosaic kernel (2 on megacore-style
    chips: v4 / v5p / v7x; 1 on v2/v3-per-core, v5e, v6e)."""
    try:
        kind = jax.devices()[0].device_kind.lower()
    except Exception:
        return 1
    return 2 if any(tag in kind for tag in ("v7", "v5p", "v4")) else 1


def _choose_tiling(B, num_tcs):
    """Pick (batch_tile, grid_len).  The kernel is overhead-bound, so use one
    grid step on single-TC chips, exactly num_tcs balanced 'parallel' tiles on
    multi-TC chips, and fixed 2048-row tiles (ragged, masked last block) only
    for very large batches."""
    if num_tcs <= 1 or B <= 16:
        if B <= _SINGLE_TILE_CAP:
            return _round_up(B, 8), 1
    else:
        tile = _round_up(pl.cdiv(B, num_tcs), 8)
        if tile <= _SINGLE_TILE_CAP:
            return tile, pl.cdiv(B, tile)
    return _SINGLE_TILE_CAP, pl.cdiv(B, _SINGLE_TILE_CAP)


def _pallas_forward(state, packed, *, tile, grid_len, single_buffer_weights):
    B, d_in = state.shape
    NP = packed["out_pad"]

    def wspec(shape, index_map):
        # Constant-index weights/biases stay resident across grid steps; request
        # single buffering to skip the redundant second VMEM buffer.
        if single_buffer_weights:
            return pl.BlockSpec(shape, index_map, pipeline_mode=pl.Buffered(1))
        return pl.BlockSpec(shape, index_map)

    return pl.pallas_call(
        actor_kernel,
        out_shape=jax.ShapeDtypeStruct((B, NP), jnp.float32),
        grid_spec=pltpu.PrefetchScalarGridSpec(
            num_scalar_prefetch=0,
            grid=(grid_len,),
            in_specs=[
                pl.BlockSpec((tile, d_in), lambda i: (i, 0)),          # state tile (f32)
                wspec(packed["w1"].shape, lambda i: (0, 0)),           # fc1 weight
                wspec(packed["ws"].shape, lambda i: (0, 0, 0)),        # fc2+fc3 weights
                wspec(packed["b"].shape, lambda i: (0, 0)),            # fc1..fc3 biases
                wspec(packed["wmu"].shape, lambda i: (0, 0)),          # mu weight (narrow)
                wspec(packed["bmu"].shape, lambda i: (0, 0)),          # mu bias (narrow)
            ],
            out_specs=pl.BlockSpec((tile, NP), lambda i: (i, 0)),
        ),
        compiler_params=pltpu.CompilerParams(
            dimension_semantics=("parallel",)),
    )(state, packed["w1"], packed["ws"], packed["b"], packed["wmu"], packed["bmu"])


def actor_forward(state, packed, *, batch_tile=None):
    """Run the fused actor MLP Pallas kernel.

    state : [B, D_in] float32 (passed to the kernel as-is; no wrapper cast/pad)
    packed: output of pack_params()
    """
    B, d_in = state.shape
    assert d_in == packed["d_in"], "state feature dim mismatch with packed params"

    if batch_tile is None:
        tile, grid_len = _choose_tiling(B, _num_tensorcores())
    else:
        tile, grid_len = batch_tile, pl.cdiv(B, batch_tile)

    try:
        out = _pallas_forward(state, packed, tile=tile, grid_len=grid_len,
                              single_buffer_weights=True)
    except Exception:
        # pl.Buffered(1) unsupported on this JAX/Mosaic version -> default
        # double buffering (costs ~100 KB extra VMEM, otherwise identical).
        out = _pallas_forward(state, packed, tile=tile, grid_len=grid_len,
                              single_buffer_weights=False)
    return out[:, : packed["n_actions"]]


# --------------------------------------------------------------------------
# Init (matches PyTorch ActorNetwork.initialization) + reference
# --------------------------------------------------------------------------
def xavier_uniform(key, fan_in, fan_out, gain):
    """Deterministic Xavier-uniform init (same formula as nn.init.xavier_uniform_).
    Stored as [in, out] (transposed vs PyTorch) so the kernel does x @ W."""
    bound = gain * math.sqrt(6.0 / (fan_in + fan_out))
    return jax.random.uniform(key, (fan_in, fan_out), jnp.float32, -bound, bound)


def linear_bias_default(key, fan_in, fan_out):
    """PyTorch nn.Linear default bias init: U(-1/sqrt(fan_in), 1/sqrt(fan_in))."""
    bound = 1.0 / math.sqrt(fan_in)
    return jax.random.uniform(key, (1, fan_out), jnp.float32, -bound, bound)


def make_params(key, input_dim, fc1_dims, fc2_dims, fc3_dims, n_actions):
    gain_lrelu = math.sqrt(2.0 / (1.0 + 0.01 ** 2))  # calculate_gain('leaky_relu')
    gain_tanh = 5.0 / 3.0                            # calculate_gain('tanh')
    ks = jax.random.split(key, 8)
    return {
        "w1": xavier_uniform(ks[0], input_dim, fc1_dims, gain_lrelu),
        "b1": linear_bias_default(ks[1], input_dim, fc1_dims),
        "w2": xavier_uniform(ks[2], fc1_dims, fc2_dims, gain_lrelu),
        "b2": linear_bias_default(ks[3], fc1_dims, fc2_dims),
        "w3": xavier_uniform(ks[4], fc2_dims, fc3_dims, gain_lrelu),
        "b3": linear_bias_default(ks[5], fc2_dims, fc3_dims),
        "wmu": xavier_uniform(ks[6], fc3_dims, n_actions, gain_tanh),
        "bmu": linear_bias_default(ks[7], fc3_dims, n_actions),
    }


def reference_forward(state, p):
    """Plain-JAX f32 reference for correctness checking."""
    h = _leaky_relu(state @ p["w1"] + p["b1"])
    h = _leaky_relu(h @ p["w2"] + p["b2"])
    h = _leaky_relu(h @ p["w3"] + p["b3"])
    return jax.nn.sigmoid(h @ p["wmu"] + p["bmu"])


if __name__ == "__main__":
    # Shapes consistent with ActorNetwork(input_dims=(16,), fc1=64, fc2=64,
    # fc3=32, n_actions=4).  Two batch sizes: 256 (training-style batch; two
    # balanced tiles on multi-TC chips, single step on v5e/v6e) and 5 (tiny
    # odd actor-step batch exercising the no-pad masked-tail path).
    D_IN, FC1, FC2, FC3, N_ACT = 16, 64, 64, 32, 4

    key = jax.random.PRNGKey(0)
    k_params, k_state = jax.random.split(key)

    params = make_params(k_params, D_IN, FC1, FC2, FC3, N_ACT)
    packed = pack_params(params)

    for B in (256, 5):
        state = jax.random.normal(jax.random.fold_in(k_state, B), (B, D_IN),
                                  dtype=jnp.float32)
        out = jax.block_until_ready(actor_forward(state, packed))
        ref = reference_forward(state, params)
        assert out.shape == (B, N_ACT), (out.shape, (B, N_ACT))
        max_err = float(jnp.max(jnp.abs(out - ref)))
        # bf16 matmuls + approx reciprocal vs f32 reference -> loose tolerance.
        assert max_err < 3e-2, f"Pallas kernel mismatch vs reference at B={B} (max abs err {max_err})"

    print("KERNEL_OK")
</pallas_src>

<mosaic_0001>
module attributes {stable_mosaic.version = 11 : i64} {
  func.func @actor_kernel(%arg0: i32, %arg1: memref<256x16xf32, #tpu.memory_space<vmem>>, %arg2: memref<16x128xbf16, #tpu.memory_space<vmem>>, %arg3: memref<2x128x128xbf16, #tpu.memory_space<vmem>>, %arg4: memref<3x128xf32, #tpu.memory_space<vmem>>, %arg5: memref<128x8xbf16, #tpu.memory_space<vmem>>, %arg6: memref<1x8xf32, #tpu.memory_space<vmem>>, %arg7: memref<256x8xf32, #tpu.memory_space<vmem>>) attributes {dimension_semantics = [#tpu.dimension_semantics<parallel>], iteration_bounds = array<i64: 1>, scalar_prefetch = 0 : i64, scratch_operands = 0 : i64, tpu.core_type = #tpu.core_type<tc>, window_params = [{transform_indices = @transform_0, window_bounds = array<i64: 256, 16>}, {pipeline_mode = #tpu.pipeline_mode<synchronous>, transform_indices = @transform_1, window_bounds = array<i64: 16, 128>}, {pipeline_mode = #tpu.pipeline_mode<synchronous>, transform_indices = @transform_2, window_bounds = array<i64: 2, 128, 128>}, {pipeline_mode = #tpu.pipeline_mode<synchronous>, transform_indices = @transform_3, window_bounds = array<i64: 3, 128>}, {pipeline_mode = #tpu.pipeline_mode<synchronous>, transform_indices = @transform_4, window_bounds = array<i64: 128, 8>}, {pipeline_mode = #tpu.pipeline_mode<synchronous>, transform_indices = @transform_5, window_bounds = array<i64: 1, 8>}, {transform_indices = @transform_6, window_bounds = array<i64: 256, 8>}]} {
    %c0 = arith.constant 0 : index
    %c0_0 = arith.constant 0 : index
    %0 = vector.load %arg1[%c0, %c0_0] : memref<256x16xf32, #tpu.memory_space<vmem>>, vector<256x16xf32>
    %1 = arith.truncf %0 : vector<256x16xf32> to vector<256x16xbf16>
    %c0_1 = arith.constant 0 : index
    %c0_2 = arith.constant 0 : index
    %2 = vector.load %arg2[%c0_1, %c0_2] : memref<16x128xbf16, #tpu.memory_space<vmem>>, vector<16x128xbf16>
    %cst = arith.constant dense<0.000000e+00> : vector<256x128xf32>
    %3 = tpu.matmul %1, %2, %cst {dimension_numbers = #tpu.dot_dimension_numbers<[1], [0], [0], [1], [0, 0, 1, 1], [], []>} : vector<256x16xbf16>, vector<16x128xbf16>, vector<256x128xf32> -> vector<256x128xf32>
    %c0_3 = arith.constant 0 : index
    %c0_4 = arith.constant 0 : index
    %4 = vector.load %arg4[%c0_3, %c0_4] : memref<3x128xf32, #tpu.memory_space<vmem>>, vector<1x128xf32>
    %5 = vector.broadcast %4 : vector<1x128xf32> to vector<256x128xf32>
    %6 = arith.addf %3, %5 : vector<256x128xf32>
    %cst_5 = arith.constant 0.000000e+00 : f32
    %7 = vector.broadcast %cst_5 : f32 to vector<256x128xf32>
    %8 = arith.cmpf ogt, %6, %7 : vector<256x128xf32>
    %cst_6 = arith.constant 0.00999999977 : f32
    %9 = vector.broadcast %cst_6 : f32 to vector<256x128xf32>
    %10 = arith.mulf %9, %6 : vector<256x128xf32>
    %11 = arith.select %8, %6, %10 : vector<256x128xi1>, vector<256x128xf32>
    %12 = arith.truncf %11 : vector<256x128xf32> to vector<256x128xbf16>
    %c0_7 = arith.constant 0 : index
    %c0_8 = arith.constant 0 : index
    %c0_9 = arith.constant 0 : index
    %13 = vector.load %arg3[%c0_7, %c0_8, %c0_9] : memref<2x128x128xbf16, #tpu.memory_space<vmem>>, vector<1x128x128xbf16>
    %14 = vector.shape_cast %13 : vector<1x128x128xbf16> to vector<128x128xbf16>
    %cst_10 = arith.constant dense<0.000000e+00> : vector<256x128xf32>
    %15 = tpu.matmul %12, %14, %cst_10 {dimension_numbers = #tpu.dot_dimension_numbers<[1], [0], [0], [1], [0, 0, 1, 1], [], []>} : vector<256x128xbf16>, vector<128x128xbf16>, vector<256x128xf32> -> vector<256x128xf32>
    %c1 = arith.constant 1 : index
    %c0_11 = arith.constant 0 : index
    %16 = vector.load %arg4[%c1, %c0_11] : memref<3x128xf32, #tpu.memory_space<vmem>>, vector<1x128xf32>
    %17 = vector.broadcast %16 : vector<1x128xf32> to vector<256x128xf32>
    %18 = arith.addf %15, %17 : vector<256x128xf32>
    %cst_12 = arith.constant 0.000000e+00 : f32
    %19 = vector.broadcast %cst_12 : f32 to vector<256x128xf32>
    %20 = arith.cmpf ogt, %18, %19 : vector<256x128xf32>
    %cst_13 = arith.constant 0.00999999977 : f32
    %21 = vector.broadcast %cst_13 : f32 to vector<256x128xf32>
    %22 = arith.mulf %21, %18 : vector<256x128xf32>
    %23 = arith.select %20, %18, %22 : vector<256x128xi1>, vector<256x128xf32>
    %24 = arith.truncf %23 : vector<256x128xf32> to vector<256x128xbf16>
    %c1_14 = arith.constant 1 : index
    %c0_15 = arith.constant 0 : index
    %c0_16 = arith.constant 0 : index
    %25 = vector.load %arg3[%c1_14, %c0_15, %c0_16] : memref<2x128x128xbf16, #tpu.memory_space<vmem>>, vector<1x128x128xbf16>
    %26 = vector.shape_cast %25 : vector<1x128x128xbf16> to vector<128x128xbf16>
    %cst_17 = arith.constant dense<0.000000e+00> : vector<256x128xf32>
    %27 = tpu.matmul %24, %26, %cst_17 {dimension_numbers = #tpu.dot_dimension_numbers<[1], [0], [0], [1], [0, 0, 1, 1], [], []>} : vector<256x128xbf16>, vector<128x128xbf16>, vector<256x128xf32> -> vector<256x128xf32>
    %c2 = arith.constant 2 : index
    %c0_18 = arith.constant 0 : index
    %28 = vector.load %arg4[%c2, %c0_18] : memref<3x128xf32, #tpu.memory_space<vmem>>, vector<1x128xf32>
    %29 = vector.broadcast %28 : vector<1x128xf32> to vector<256x128xf32>
    %30 = arith.addf %27, %29 : vector<256x128xf32>
    %cst_19 = arith.constant 0.000000e+00 : f32
    %31 = vector.broadcast %cst_19 : f32 to vector<256x128xf32>
    %32 = arith.cmpf ogt, %30, %31 : vector<256x128xf32>
    %cst_20 = arith.constant 0.00999999977 : f32
    %33 = vector.broadcast %cst_20 : f32 to vector<256x128xf32>
    %34 = arith.mulf %33, %30 : vector<256x128xf32>
    %35 = arith.select %32, %30, %34 : vector<256x128xi1>, vector<256x128xf32>
    %36 = arith.truncf %35 : vector<256x128xf32> to vector<256x128xbf16>
    %c0_21 = arith.constant 0 : index
    %c0_22 = arith.constant 0 : index
    %37 = vector.load %arg5[%c0_21, %c0_22] : memref<128x8xbf16, #tpu.memory_space<vmem>>, vector<128x8xbf16>
    %cst_23 = arith.constant dense<0.000000e+00> : vector<256x8xf32>
    %38 = tpu.matmul %36, %37, %cst_23 {dimension_numbers = #tpu.dot_dimension_numbers<[1], [0], [0], [1], [0, 0, 1, 1], [], []>} : vector<256x128xbf16>, vector<128x8xbf16>, vector<256x8xf32> -> vector<256x8xf32>
    %c0_24 = arith.constant 0 : index
    %c0_25 = arith.constant 0 : index
    %39 = vector.load %arg6[%c0_24, %c0_25] : memref<1x8xf32, #tpu.memory_space<vmem>>, vector<1x8xf32>
    %40 = vector.broadcast %39 : vector<1x8xf32> to vector<256x8xf32>
    %41 = arith.addf %38, %40 : vector<256x8xf32>
    %cst_26 = arith.constant 0.000000e+00 : f32
    %42 = vector.broadcast %cst_26 : f32 to vector<256x8xf32>
    %43 = arith.subf %42, %41 : vector<256x8xf32>
    %44 = math.exp %43 : vector<256x8xf32>
    %cst_27 = arith.constant 1.000000e+00 : f32
    %45 = vector.broadcast %cst_27 : f32 to vector<256x8xf32>
    %46 = arith.addf %45, %44 : vector<256x8xf32>
    %47 = tpu.reciprocal %46 {approx = true} : vector<256x8xf32> -> vector<256x8xf32>
    %c0_28 = arith.constant 0 : index
    %c0_29 = arith.constant 0 : index
    %48 = vector.load %arg7[%c0_28, %c0_29] : memref<256x8xf32, #tpu.memory_space<vmem>>, vector<256x8xf32>
    tpu.vector_store %arg7[%c0_28, %c0_29], %47 {strides = array<i32>} : memref<256x8xf32, #tpu.memory_space<vmem>>, vector<256x8xf32>,
    return
  }
  func.func @transform_0(%arg0: i32) -> (i32, i32) {
    %c0_i32 = arith.constant 0 : i32
    %c0_i32_0 = arith.constant 0 : i32
    return %arg0, %c0_i32 : i32, i32
  }
  func.func @transform_1(%arg0: i32) -> (i32, i32) {
    %c0_i32 = arith.constant 0 : i32
    %c0_i32_0 = arith.constant 0 : i32
    %c0_i32_1 = arith.constant 0 : i32
    return %c0_i32, %c0_i32_0 : i32, i32
  }
  func.func @transform_2(%arg0: i32) -> (i32, i32, i32) {
    %c0_i32 = arith.constant 0 : i32
    %c0_i32_0 = arith.constant 0 : i32
    %c0_i32_1 = arith.constant 0 : i32
    %c0_i32_2 = arith.constant 0 : i32
    return %c0_i32, %c0_i32_0, %c0_i32_1 : i32, i32, i32
  }
  func.func @transform_3(%arg0: i32) -> (i32, i32) {
    %c0_i32 = arith.constant 0 : i32
    %c0_i32_0 = arith.constant 0 : i32
    %c0_i32_1 = arith.constant 0 : i32
    return %c0_i32, %c0_i32_0 : i32, i32
  }
  func.func @transform_4(%arg0: i32) -> (i32, i32) {
    %c0_i32 = arith.constant 0 : i32
    %c0_i32_0 = arith.constant 0 : i32
    %c0_i32_1 = arith.constant 0 : i32
    return %c0_i32, %c0_i32_0 : i32, i32
  }
  func.func @transform_5(%arg0: i32) -> (i32, i32) {
    %c0_i32 = arith.constant 0 : i32
    %c0_i32_0 = arith.constant 0 : i32
    %c0_i32_1 = arith.constant 0 : i32
    return %c0_i32, %c0_i32_0 : i32, i32
  }
  func.func @transform_6(%arg0: i32) -> (i32, i32) {
    %c0_i32 = arith.constant 0 : i32
    %c0_i32_0 = arith.constant 0 : i32
    return %arg0, %c0_i32 : i32, i32
  }
}

module attributes {stable_mosaic.version = 11 : i64} {
  func.func @actor_kernel(%arg0: i32, %arg1: memref<256x16xf32, #tpu.memory_space<vmem>>, %arg2: memref<16x128xbf16, #tpu.memory_space<vmem>>, %arg3: memref<2x128x128xbf16, #tpu.memory_space<vmem>>, %arg4: memref<3x128xf32, #tpu.memory_space<vmem>>, %arg5: memref<128x8xbf16, #tpu.memory_space<vmem>>, %arg6: memref<1x8xf32, #tpu.memory_space<vmem>>, %arg7: memref<256x8xf32, #tpu.memory_space<vmem>>) attributes {dimension_semantics = [#tpu.dimension_semantics<parallel>], iteration_bounds = array<i64: 1>, scalar_prefetch = 0 : i64, scratch_operands = 0 : i64, tpu.core_type = #tpu.core_type<tc>, window_params = [{transform_indices = @transform_0, window_bounds = array<i64: 256, 16>}, {pipeline_mode = #tpu.pipeline_mode<synchronous>, transform_indices = @transform_1, window_bounds = array<i64: 16, 128>}, {pipeline_mode = #tpu.pipeline_mode<synchronous>, transform_indices = @transform_2, window_bounds = array<i64: 2, 128, 128>}, {pipeline_mode = #tpu.pipeline_mode<synchronous>, transform_indices = @transform_3, window_bounds = array<i64: 3, 128>}, {pipeline_mode = #tpu.pipeline_mode<synchronous>, transform_indices = @transform_4, window_bounds = array<i64: 128, 8>}, {pipeline_mode = #tpu.pipeline_mode<synchronous>, transform_indices = @transform_5, window_bounds = array<i64: 1, 8>}, {transform_indices = @transform_6, window_bounds = array<i64: 256, 8>}]} {
    %c0 = arith.constant 0 : index
    %c0_0 = arith.constant 0 : index
    %0 = vector.load %arg1[%c0, %c0_0] : memref<256x16xf32, #tpu.memory_space<vmem>>, vector<256x16xf32>
    %1 = arith.truncf %0 : vector<256x16xf32> to vector<256x16xbf16>
    %c0_1 = arith.constant 0 : index
    %c0_2 = arith.constant 0 : index
    %2 = vector.load %arg2[%c0_1, %c0_2] : memref<16x128xbf16, #tpu.memory_space<vmem>>, vector<16x128xbf16>
    %cst = arith.constant dense<0.000000e+00> : vector<256x128xf32>
    %3 = tpu.matmul %1, %2, %cst {dimension_numbers = #tpu.dot_dimension_numbers<[1], [0], [0], [1], [0, 0, 1, 1], [], []>} : vector<256x16xbf16>, vector<16x128xbf16>, vector<256x128xf32> -> vector<256x128xf32>
    %c0_3 = arith.constant 0 : index
    %c0_4 = arith.constant 0 : index
    %4 = vector.load %arg4[%c0_3, %c0_4] : memref<3x128xf32, #tpu.memory_space<vmem>>, vector<1x128xf32>
    %5 = vector.broadcast %4 : vector<1x128xf32> to vector<256x128xf32>
    %6 = arith.addf %3, %5 : vector<256x128xf32>
    %cst_5 = arith.constant 0.000000e+00 : f32
    %7 = vector.broadcast %cst_5 : f32 to vector<256x128xf32>
    %8 = arith.cmpf ogt, %6, %7 : vector<256x128xf32>
    %cst_6 = arith.constant 0.00999999977 : f32
    %9 = vector.broadcast %cst_6 : f32 to vector<256x128xf32>
    %10 = arith.mulf %9, %6 : vector<256x128xf32>
    %11 = arith.select %8, %6, %10 : vector<256x128xi1>, vector<256x128xf32>
    %12 = arith.truncf %11 : vector<256x128xf32> to vector<256x128xbf16>
    %c0_7 = arith.constant 0 : index
    %c0_8 = arith.constant 0 : index
    %c0_9 = arith.constant 0 : index
    %13 = vector.load %arg3[%c0_7, %c0_8, %c0_9] : memref<2x128x128xbf16, #tpu.memory_space<vmem>>, vector<1x128x128xbf16>
    %14 = vector.shape_cast %13 : vector<1x128x128xbf16> to vector<128x128xbf16>
    %cst_10 = arith.constant dense<0.000000e+00> : vector<256x128xf32>
    %15 = tpu.matmul %12, %14, %cst_10 {dimension_numbers = #tpu.dot_dimension_numbers<[1], [0], [0], [1], [0, 0, 1, 1], [], []>} : vector<256x128xbf16>, vector<128x128xbf16>, vector<256x128xf32> -> vector<256x128xf32>
    %c1 = arith.constant 1 : index
    %c0_11 = arith.constant 0 : index
    %16 = vector.load %arg4[%c1, %c0_11] : memref<3x128xf32, #tpu.memory_space<vmem>>, vector<1x128xf32>
    %17 = vector.broadcast %16 : vector<1x128xf32> to vector<256x128xf32>
    %18 = arith.addf %15, %17 : vector<256x128xf32>
    %cst_12 = arith.constant 0.000000e+00 : f32
    %19 = vector.broadcast %cst_12 : f32 to vector<256x128xf32>
    %20 = arith.cmpf ogt, %18, %19 : vector<256x128xf32>
    %cst_13 = arith.constant 0.00999999977 : f32
    %21 = vector.broadcast %cst_13 : f32 to vector<256x128xf32>
    %22 = arith.mulf %21, %18 : vector<256x128xf32>
    %23 = arith.select %20, %18, %22 : vector<256x128xi1>, vector<256x128xf32>
    %24 = arith.truncf %23 : vector<256x128xf32> to vector<256x128xbf16>
    %c1_14 = arith.constant 1 : index
    %c0_15 = arith.constant 0 : index
    %c0_16 = arith.constant 0 : index
    %25 = vector.load %arg3[%c1_14, %c0_15, %c0_16] : memref<2x128x128xbf16, #tpu.memory_space<vmem>>, vector<1x128x128xbf16>
    %26 = vector.shape_cast %25 : vector<1x128x128xbf16> to vector<128x128xbf16>
    %cst_17 = arith.constant dense<0.000000e+00> : vector<256x128xf32>
    %27 = tpu.matmul %24, %26, %cst_17 {dimension_numbers = #tpu.dot_dimension_numbers<[1], [0], [0], [1], [0, 0, 1, 1], [], []>} : vector<256x128xbf16>, vector<128x128xbf16>, vector<256x128xf32> -> vector<256x128xf32>
    %c2 = arith.constant 2 : index
    %c0_18 = arith.constant 0 : index
    %28 = vector.load %arg4[%c2, %c0_18] : memref<3x128xf32, #tpu.memory_space<vmem>>, vector<1x128xf32>
    %29 = vector.broadcast %28 : vector<1x128xf32> to vector<256x128xf32>
    %30 = arith.addf %27, %29 : vector<256x128xf32>
    %cst_19 = arith.constant 0.000000e+00 : f32
    %31 = vector.broadcast %cst_19 : f32 to vector<256x128xf32>
    %32 = arith.cmpf ogt, %30, %31 : vector<256x128xf32>
    %cst_20 = arith.constant 0.00999999977 : f32
    %33 = vector.broadcast %cst_20 : f32 to vector<256x128xf32>
    %34 = arith.mulf %33, %30 : vector<256x128xf32>
    %35 = arith.select %32, %30, %34 : vector<256x128xi1>, vector<256x128xf32>
    %36 = arith.truncf %35 : vector<256x128xf32> to vector<256x128xbf16>
    %c0_21 = arith.constant 0 : index
    %c0_22 = arith.constant 0 : index
    %37 = vector.load %arg5[%c0_21, %c0_22] : memref<128x8xbf16, #tpu.memory_space<vmem>>, vector<128x8xbf16>
    %cst_23 = arith.constant dense<0.000000e+00> : vector<256x8xf32>
    %38 = tpu.matmul %36, %37, %cst_23 {dimension_numbers = #tpu.dot_dimension_numbers<[1], [0], [0], [1], [0, 0, 1, 1], [], []>} : vector<256x128xbf16>, vector<128x8xbf16>, vector<256x8xf32> -> vector<256x8xf32>
    %c0_24 = arith.constant 0 : index
    %c0_25 = arith.constant 0 : index
    %39 = vector.load %arg6[%c0_24, %c0_25] : memref<1x8xf32, #tpu.memory_space<vmem>>, vector<1x8xf32>
    %40 = vector.broadcast %39 : vector<1x8xf32> to vector<256x8xf32>
    %41 = arith.addf %38, %40 : vector<256x8xf32>
    %cst_26 = arith.constant 0.000000e+00 : f32
    %42 = vector.broadcast %cst_26 : f32 to vector<256x8xf32>
    %43 = arith.subf %42, %41 : vector<256x8xf32>
    %44 = math.exp %43 : vector<256x8xf32>
    %cst_27 = arith.constant 1.000000e+00 : f32
    %45 = vector.broadcast %cst_27 : f32 to vector<256x8xf32>
    %46 = arith.addf %45, %44 : vector<256x8xf32>
    %47 = tpu.reciprocal %46 {approx = true} : vector<256x8xf32> -> vector<256x8xf32>
    %c0_28 = arith.constant 0 : index
    %c0_29 = arith.constant 0 : index
    %48 = vector.load %arg7[%c0_28, %c0_29] : memref<256x8xf32, #tpu.memory_space<vmem>>, vector<256x8xf32>
    tpu.vector_store %arg7[%c0_28, %c0_29], %47 {strides = array<i32>} : memref<256x8xf32, #tpu.memory_space<vmem>>, vector<256x8xf32>,
    return
  }
  func.func @transform_0(%arg0: i32) -> (i32, i32) {
    %c0_i32 = arith.constant 0 : i32
    %c0_i32_0 = arith.constant 0 : i32
    return %arg0, %c0_i32 : i32, i32
  }
  func.func @transform_1(%arg0: i32) -> (i32, i32) {
    %c0_i32 = arith.constant 0 : i32
    %c0_i32_0 = arith.constant 0 : i32
    %c0_i32_1 = arith.constant 0 : i32
    return %c0_i32, %c0_i32_0 : i32, i32
  }
  func.func @transform_2(%arg0: i32) -> (i32, i32, i32) {
    %c0_i32 = arith.constant 0 : i32
    %c0_i32_0 = arith.constant 0 : i32
    %c0_i32_1 = arith.constant 0 : i32
    %c0_i32_2 = arith.constant 0 : i32
    return %c0_i32, %c0_i32_0, %c0_i32_1 : i32, i32, i32
  }
  func.func @transform_3(%arg0: i32) -> (i32, i32) {
    %c0_i32 = arith.constant 0 : i32
    %c0_i32_0 = arith.constant 0 : i32
    %c0_i32_1 = arith.constant 0 : i32
    return %c0_i32, %c0_i32_0 : i32, i32
  }
  func.func @transform_4(%arg0: i32) -> (i32, i32) {
    %c0_i32 = arith.constant 0 : i32
    %c0_i32_0 = arith.constant 0 : i32
    %c0_i32_1 = arith.constant 0 : i32
    return %c0_i32, %c0_i32_0 : i32, i32
  }
  func.func @transform_5(%arg0: i32) -> (i32, i32) {
    %c0_i32 = arith.constant 0 : i32
    %c0_i32_0 = arith.constant 0 : i32
    %c0_i32_1 = arith.constant 0 : i32
    return %c0_i32, %c0_i32_0 : i32, i32
  }
  func.func @transform_6(%arg0: i32) -> (i32, i32) {
    %c0_i32 = arith.constant 0 : i32
    %c0_i32_0 = arith.constant 0 : i32
    return %arg0, %c0_i32 : i32, i32
  }
}

</mosaic_0001>

<llo_original>
// kernel: tpu_custom_call.1
$region0: #{tpu_custom_call.1}
  #allocation0 [shape = 'u32[]', space=smem, size = 0x4, offset = 0x4, fixed_abs, tag = 'smem constant byte address 0x4 - core index']
  #allocation1 [shape = 'u32[72,128]{1,0:T(1,128)}', space=vmem, size = 0x9000, scoped, tag = 'internal scratch']
  %s0 = inlined_call_operand.vmem [shape: f32[256,16], index: 0, kind: input, shape index: {}]
  %s1 = inlined_call_operand.vmem [shape: bf16[16,128], index: 1, kind: input, shape index: {}]
  %s2 = inlined_call_operand.vmem [shape: bf16[2,128,128], index: 2, kind: input, shape index: {}]
  %s3 = inlined_call_operand.vmem [shape: f32[3,128], index: 3, kind: input, shape index: {}]
  %s4 = inlined_call_operand.vmem [shape: bf16[128,8], index: 4, kind: input, shape index: {}]
  %s5 = inlined_call_operand.vmem [shape: f32[1,8], index: 5, kind: input, shape index: {}]
  %s6 = inlined_call_operand.vmem [shape: f32[256,8], index: 6, kind: output, shape index: {}]
  %s7 = sld [smem:[#allocation0]]
  $region34: #{tpu_custom_call.1} parent=0
    _
  %s9 = ssub.s32 1, %s7
  %s10 = scalar_select 0, %s9, %s7
  // Predicated region
  $region2: #{tpu_custom_call.1} parent=0 // pred_check
    _
  $region3: #{tpu_custom_call.1} parent=0 // pred_check_branch
    %12 = sbr.rel (0) target = $region5
  $region4: #{tpu_custom_call.1} parent=0 // pred_region
    _
  $region5: #{tpu_custom_call.1} parent=0 // pred_fallthru
    _
  // Predicated region
  $region6: #{tpu_custom_call.1} parent=0 // pred_check
    _
  $region7: #{tpu_custom_call.1} parent=0 // pred_check_branch
    %14 = sbr.rel (0) target = $region9
  $region8: #{tpu_custom_call.1} parent=0 // pred_region
    _
  $region9: #{tpu_custom_call.1} parent=0 // pred_fallthru
    _
  // Predicated region
  $region10: #{tpu_custom_call.1} parent=0 // pred_check
    _
  $region11: #{tpu_custom_call.1} parent=0 // pred_check_branch
    %16 = sbr.rel (0) target = $region13
  $region12: #{tpu_custom_call.1} parent=0 // pred_region
    _
  $region13: #{tpu_custom_call.1} parent=0 // pred_fallthru
    _
  // Predicated region
  $region14: #{tpu_custom_call.1} parent=0 // pred_check
    _
  $region15: #{tpu_custom_call.1} parent=0 // pred_check_branch
    %18 = sbr.rel (0) target = $region17
  $region16: #{tpu_custom_call.1} parent=0 // pred_region
    _
  $region17: #{tpu_custom_call.1} parent=0 // pred_fallthru
    _
  // Predicated region
  $region18: #{tpu_custom_call.1} parent=0 // pred_check
    _
  $region19: #{tpu_custom_call.1} parent=0 // pred_check_branch
    %20 = sbr.rel (0) target = $region21
  $region20: #{tpu_custom_call.1} parent=0 // pred_region
    _
  $region21: #{tpu_custom_call.1} parent=0 // pred_fallthru
    _
  // Predicated region
  $region22: #{tpu_custom_call.1} parent=0 // pred_check
    _
  $region23: #{tpu_custom_call.1} parent=0 // pred_check_branch
    %22 = sbr.rel (0) target = $region25
  $region24: #{tpu_custom_call.1} parent=0 // pred_region
    _
  $region25: #{tpu_custom_call.1} parent=0 // pred_fallthru
    _
  %v24 = vld [vmem:[%s0] sm:$0xff]
  %v25 = vld [vmem:[%s0 + $0x8] sm:$0xff]
  %v26 = vld [vmem:[%s0 + $0x10] sm:$0xff]
  %v27 = vld [vmem:[%s0 + $0x18] sm:$0xff]
  %v28 = vld [vmem:[%s0 + $0x20] sm:$0xff]
  %v29 = vld [vmem:[%s0 + $0x28] sm:$0xff]
  %v30 = vld [vmem:[%s0 + $0x30] sm:$0xff]
  %v31 = vld [vmem:[%s0 + $0x38] sm:$0xff]
  %v32 = vld [vmem:[%s0 + $0x40] sm:$0xff]
  %v33 = vld [vmem:[%s0 + $0x48] sm:$0xff]
  %v34 = vld [vmem:[%s0 + $0x50] sm:$0xff]
  %v35 = vld [vmem:[%s0 + $0x58] sm:$0xff]
  %v36 = vld [vmem:[%s0 + $0x60] sm:$0xff]
  %v37 = vld [vmem:[%s0 + $0x68] sm:$0xff]
  %v38 = vld [vmem:[%s0 + $0x70] sm:$0xff]
  %v39 = vld [vmem:[%s0 + $0x78] sm:$0xff]
  %v40 = vld [vmem:[%s0 + $0x80] sm:$0xff]
  %v41 = vld [vmem:[%s0 + $0x88] sm:$0xff]
  %v42 = vld [vmem:[%s0 + $0x90] sm:$0xff]
  %v43 = vld [vmem:[%s0 + $0x98] sm:$0xff]
  %v44 = vld [vmem:[%s0 + $0xa0] sm:$0xff]
  %v45 = vld [vmem:[%s0 + $0xa8] sm:$0xff]
  %v46 = vld [vmem:[%s0 + $0xb0] sm:$0xff]
  %v47 = vld [vmem:[%s0 + $0xb8] sm:$0xff]
  %v48 = vld [vmem:[%s0 + $0xc0] sm:$0xff]
  %v49 = vld [vmem:[%s0 + $0xc8] sm:$0xff]
  %v50 = vld [vmem:[%s0 + $0xd0] sm:$0xff]
  %v51 = vld [vmem:[%s0 + $0xd8] sm:$0xff]
  %v52 = vld [vmem:[%s0 + $0xe0] sm:$0xff]
  %v53 = vld [vmem:[%s0 + $0xe8] sm:$0xff]
  %v54 = vld [vmem:[%s0 + $0xf0] sm:$0xff]
  %v55 = vld [vmem:[%s0 + $0xf8] sm:$0xff]
  %v56 = vpack.c.bf16 %v25, %v24
  %v57 = vpack.c.bf16 %v27, %v26
  %v58 = vpack.c.bf16 %v29, %v28
  %v59 = vpack.c.bf16 %v31, %v30
  %v60 = vpack.c.bf16 %v33, %v32
  %v61 = vpack.c.bf16 %v35, %v34
  %v62 = vpack.c.bf16 %v37, %v36
  %v63 = vpack.c.bf16 %v39, %v38
  %v64 = vpack.c.bf16 %v41, %v40
  %v65 = vpack.c.bf16 %v43, %v42
  %v66 = vpack.c.bf16 %v45, %v44
  %v67 = vpack.c.bf16 %v47, %v46
  %v68 = vpack.c.bf16 %v49, %v48
  %v69 = vpack.c.bf16 %v51, %v50
  %v70 = vpack.c.bf16 %v53, %v52
  %v71 = vpack.c.bf16 %v55, %v54
  %v72 = vld [vmem:[%s1] sm:$0xf]
  %v73 = vld [vmem:[%s1 + $0x4] sm:$0xf]
  %v74 = vld [vmem:[%s3] sm:$0x1]
  %v75 = vperm.slane %v74, 0
  %v78 = vunpack.c.l.b16 %v72
  %v79 = vunpack.c.l.b16 %v73
  %v80 = vpack.c.b16 %v79, %v78
  %vm82 = vcmask 130048
  %v84 = vsel %vm82, %v56, 0
  %v87 = vsel %vm82, %v57, 0
  %v90 = vsel %vm82, %v58, 0
  %v93 = vsel %vm82, %v59, 0
  %v96 = vsel %vm82, %v60, 0
  %v99 = vsel %vm82, %v61, 0
  %v102 = vsel %vm82, %v62, 0
  %v105 = vsel %vm82, %v63, 0
  %v108 = vsel %vm82, %v64, 0
  %v111 = vsel %vm82, %v65, 0
  %v114 = vsel %vm82, %v66, 0
  %v117 = vsel %vm82, %v67, 0
  %v120 = vsel %vm82, %v68, 0
  %v123 = vsel %vm82, %v69, 0
  %v126 = vsel %vm82, %v70, 0
  %v129 = vsel %vm82, %v71, 0
  %131 = vmatpush.bf16.msra.mxu0 0
  %132 = vmatpush.bf16.msra.mxu0 0
  %133 = vmatpush.bf16.msra.mxu0 0
  %134 = vmatpush.bf16.msra.mxu0 0
  %135 = vmatpush.bf16.msra.mxu0 0
  %136 = vmatpush.bf16.msra.mxu0 0
  %137 = vmatpush.bf16.msra.mxu0 0
  %138 = vmatpush.bf16.msra.mxu0 %v80
  %139 = vmatmul.bf16.gmra.mxu0 %v84
  %v140 = vpop.f32.mrf.mxu0
  %v141 = vadd.f32 %v75, %v140
  %v142 = vpop.f32.mrf.mxu0
  %v143 = vadd.f32 %v75, %v142
  %144 = vmatmul.bf16.gmra.mxu0 %v87
  %v145 = vpop.f32.mrf.mxu0
  %v146 = vadd.f32 %v75, %v145
  %v147 = vpop.f32.mrf.mxu0
  %v148 = vadd.f32 %v75, %v147
  %149 = vmatmul.bf16.gmra.mxu0 %v90
  %v150 = vpop.f32.mrf.mxu0
  %v151 = vadd.f32 %v75, %v150
  %v152 = vpop.f32.mrf.mxu0
  %v153 = vadd.f32 %v75, %v152
  %154 = vmatmul.bf16.gmra.mxu0 %v93
  %v155 = vpop.f32.mrf.mxu0
  %v156 = vadd.f32 %v75, %v155
  %v157 = vpop.f32.mrf.mxu0
  %v158 = vadd.f32 %v75, %v157
  %159 = vmatmul.bf16.gmra.mxu0 %v96
  %v160 = vpop.f32.mrf.mxu0
  %v161 = vadd.f32 %v75, %v160
  %v162 = vpop.f32.mrf.mxu0
  %v163 = vadd.f32 %v75, %v162
  %164 = vmatmul.bf16.gmra.mxu0 %v99
  %v165 = vpop.f32.mrf.mxu0
  %v166 = vadd.f32 %v75, %v165
  %v167 = vpop.f32.mrf.mxu0
  %v168 = vadd.f32 %v75, %v167
  %169 = vmatmul.bf16.gmra.mxu0 %v102
  %v170 = vpop.f32.mrf.mxu0
  %v171 = vadd.f32 %v75, %v170
  %v172 = vpop.f32.mrf.mxu0
  %v173 = vadd.f32 %v75, %v172
  %174 = vmatmul.bf16.gmra.mxu0 %v105
  %v175 = vpop.f32.mrf.mxu0
  %v176 = vadd.f32 %v75, %v175
  %v177 = vpop.f32.mrf.mxu0
  %v178 = vadd.f32 %v75, %v177
  %179 = vmatmul.bf16.gmra.mxu0 %v108
  %v180 = vpop.f32.mrf.mxu0
  %v181 = vadd.f32 %v75, %v180
  %v182 = vpop.f32.mrf.mxu0
  %v183 = vadd.f32 %v75, %v182
  %184 = vmatmul.bf16.gmra.mxu0 %v111
  %v185 = vpop.f32.mrf.mxu0
  %v186 = vadd.f32 %v75, %v185
  %v187 = vpop.f32.mrf.mxu0
  %v188 = vadd.f32 %v75, %v187
  %189 = vmatmul.bf16.gmra.mxu0 %v114
  %v190 = vpop.f32.mrf.mxu0
  %v191 = vadd.f32 %v75, %v190
  %v192 = vpop.f32.mrf.mxu0
  %v193 = vadd.f32 %v75, %v192
  %194 = vmatmul.bf16.gmra.mxu0 %v117
  %v195 = vpop.f32.mrf.mxu0
  %v196 = vadd.f32 %v75, %v195
  %v197 = vpop.f32.mrf.mxu0
  %v198 = vadd.f32 %v75, %v197
  %199 = vmatmul.bf16.gmra.mxu0 %v120
  %v200 = vpop.f32.mrf.mxu0
  %v201 = vadd.f32 %v75, %v200
  %v202 = vpop.f32.mrf.mxu0
  %v203 = vadd.f32 %v75, %v202
  %204 = vmatmul.bf16.gmra.mxu0 %v123
  %v205 = vpop.f32.mrf.mxu0
  %v206 = vadd.f32 %v75, %v205
  %v207 = vpop.f32.mrf.mxu0
  %v208 = vadd.f32 %v75, %v207
  %209 = vmatmul.bf16.gmra.mxu0 %v126
  %v210 = vpop.f32.mrf.mxu0
  %v211 = vadd.f32 %v75, %v210
  %v212 = vpop.f32.mrf.mxu0
  %v213 = vadd.f32 %v75, %v212
  %214 = vmatmul.bf16.gmra.mxu0 %v129
  %v215 = vpop.f32.mrf.mxu0
  %v216 = vadd.f32 %v75, %v215
  %v217 = vpop.f32.mrf.mxu0
  %v218 = vadd.f32 %v75, %v217
  %219 = vdwg.mxu0
  %vm220 = vcmp.gt.f32.partialorder %v141, 0.0
  %vm221 = vcmp.gt.f32.partialorder %v143, 0.0
  %vm222 = vcmp.gt.f32.partialorder %v146, 0.0
  %vm223 = vcmp.gt.f32.partialorder %v148, 0.0
  %vm224 = vcmp.gt.f32.partialorder %v151, 0.0
  %vm225 = vcmp.gt.f32.partialorder %v153, 0.0
  %vm226 = vcmp.gt.f32.partialorder %v156, 0.0
  %vm227 = vcmp.gt.f32.partialorder %v158, 0.0
  %vm228 = vcmp.gt.f32.partialorder %v161, 0.0
  %vm229 = vcmp.gt.f32.partialorder %v163, 0.0
  %vm230 = vcmp.gt.f32.partialorder %v166, 0.0
  %vm231 = vcmp.gt.f32.partialorder %v168, 0.0
  %vm232 = vcmp.gt.f32.partialorder %v171, 0.0
  %vm233 = vcmp.gt.f32.partialorder %v173, 0.0
  %vm234 = vcmp.gt.f32.partialorder %v176, 0.0
  %vm235 = vcmp.gt.f32.partialorder %v178, 0.0
  %vm236 = vcmp.gt.f32.partialorder %v181, 0.0
  %vm237 = vcmp.gt.f32.partialorder %v183, 0.0
  %vm238 = vcmp.gt.f32.partialorder %v186, 0.0
  %vm239 = vcmp.gt.f32.partialorder %v188, 0.0
  %vm240 = vcmp.gt.f32.partialorder %v191, 0.0
  %vm241 = vcmp.gt.f32.partialorder %v193, 0.0
  %vm242 = vcmp.gt.f32.partialorder %v196, 0.0
  %vm243 = vcmp.gt.f32.partialorder %v198, 0.0
  %vm244 = vcmp.gt.f32.partialorder %v201, 0.0
  %vm245 = vcmp.gt.f32.partialorder %v203, 0.0
  %vm246 = vcmp.gt.f32.partialorder %v206, 0.0
  %vm247 = vcmp.gt.f32.partialorder %v208, 0.0
  %vm248 = vcmp.gt.f32.partialorder %v211, 0.0
  %vm249 = vcmp.gt.f32.partialorder %v213, 0.0
  %vm250 = vcmp.gt.f32.partialorder %v216, 0.0
  %vm251 = vcmp.gt.f32.partialorder %v218, 0.0
  %v252 = vmul.f32 %v141, 0.01
  %v253 = vmul.f32 %v143, 0.01
  %v254 = vmul.f32 %v146, 0.01
  %v255 = vmul.f32 %v148, 0.01
  %v256 = vmul.f32 %v151, 0.01
  %v257 = vmul.f32 %v153, 0.01
  %v258 = vmul.f32 %v156, 0.01
  %v259 = vmul.f32 %v158, 0.01
  %v260 = vmul.f32 %v161, 0.01
  %v261 = vmul.f32 %v163, 0.01
  %v262 = vmul.f32 %v166, 0.01
  %v263 = vmul.f32 %v168, 0.01
  %v264 = vmul.f32 %v171, 0.01
  %v265 = vmul.f32 %v173, 0.01
  %v266 = vmul.f32 %v176, 0.01
  %v267 = vmul.f32 %v178, 0.01
  %v268 = vmul.f32 %v181, 0.01
  %v269 = vmul.f32 %v183, 0.01
  %v270 = vmul.f32 %v186, 0.01
  %v271 = vmul.f32 %v188, 0.01
  %v272 = vmul.f32 %v191, 0.01
  %v273 = vmul.f32 %v193, 0.01
  %v274 = vmul.f32 %v196, 0.01
  %v275 = vmul.f32 %v198, 0.01
  %v276 = vmul.f32 %v201, 0.01
  %v277 = vmul.f32 %v203, 0.01
  %v278 = vmul.f32 %v206, 0.01
  %v279 = vmul.f32 %v208, 0.01
  %v280 = vmul.f32 %v211, 0.01
  %v281 = vmul.f32 %v213, 0.01
  %v282 = vmul.f32 %v216, 0.01
  %v283 = vmul.f32 %v218, 0.01
  %v284 = vsel %vm220, %v141, %v252
  %v285 = vsel %vm221, %v143, %v253
  %v286 = vsel %vm222, %v146, %v254
  %v287 = vsel %vm223, %v148, %v255
  %v288 = vsel %vm224, %v151, %v256
  %v289 = vsel %vm225, %v153, %v257
  %v290 = vsel %vm226, %v156, %v258
  %v291 = vsel %vm227, %v158, %v259
  %v292 = vsel %vm228, %v161, %v260
  %v293 = vsel %vm229, %v163, %v261
  %v294 = vsel %vm230, %v166, %v262
  %v295 = vsel %vm231, %v168, %v263
  %v296 = vsel %vm232, %v171, %v264
  %v297 = vsel %vm233, %v173, %v265
  %v298 = vsel %vm234, %v176, %v266
  %v299 = vsel %vm235, %v178, %v267
  %v300 = vsel %vm236, %v181, %v268
  %v301 = vsel %vm237, %v183, %v269
  %v302 = vsel %vm238, %v186, %v270
  %v303 = vsel %vm239, %v188, %v271
  %v304 = vsel %vm240, %v191, %v272
  %v305 = vsel %vm241, %v193, %v273
  %v306 = vsel %vm242, %v196, %v274
  %v307 = vsel %vm243, %v198, %v275
  %v308 = vsel %vm244, %v201, %v276
  %v309 = vsel %vm245, %v203, %v277
  %v310 = vsel %vm246, %v206, %v278
  %v311 = vsel %vm247, %v208, %v279
  %v312 = vsel %vm248, %v211, %v280
  %v313 = vsel %vm249, %v213, %v281
  %v314 = vsel %vm250, %v216, %v282
  %v315 = vsel %vm251, %v218, %v283
  %v316 = vpack.c.bf16 %v285, %v284
  %v317 = vpack.c.bf16 %v287, %v286
  %v318 = vpack.c.bf16 %v289, %v288
  %v319 = vpack.c.bf16 %v291, %v290
  %v320 = vpack.c.bf16 %v293, %v292
  %v321 = vpack.c.bf16 %v295, %v294
  %v322 = vpack.c.bf16 %v297, %v296
  %v323 = vpack.c.bf16 %v299, %v298
  %v324 = vpack.c.bf16 %v301, %v300
  %v325 = vpack.c.bf16 %v303, %v302
  %v326 = vpack.c.bf16 %v305, %v304
  %v327 = vpack.c.bf16 %v307, %v306
  %v328 = vpack.c.bf16 %v309, %v308
  %v329 = vpack.c.bf16 %v311, %v310
  %v330 = vpack.c.bf16 %v313, %v312
  %v331 = vpack.c.bf16 %v315, %v314
  %v332 = vld [vmem:[%s2] sm:$0xf]
  %v333 = vld [vmem:[%s2 + $0x4] sm:$0xf]
  %v334 = vld [vmem:[%s2 + $0x8] sm:$0xf]
  %v335 = vld [vmem:[%s2 + $0xc] sm:$0xf]
  %v336 = vld [vmem:[%s2 + $0x10] sm:$0xf]
  %v337 = vld [vmem:[%s2 + $0x14] sm:$0xf]
  %v338 = vld [vmem:[%s2 + $0x18] sm:$0xf]
  %v339 = vld [vmem:[%s2 + $0x1c] sm:$0xf]
  %v340 = vld [vmem:[%s2 + $0x20] sm:$0xf]
  %v341 = vld [vmem:[%s2 + $0x24] sm:$0xf]
  %v342 = vld [vmem:[%s2 + $0x28] sm:$0xf]
  %v343 = vld [vmem:[%s2 + $0x2c] sm:$0xf]
  %v344 = vld [vmem:[%s2 + $0x30] sm:$0xf]
  %v345 = vld [vmem:[%s2 + $0x34] sm:$0xf]
  %v346 = vld [vmem:[%s2 + $0x38] sm:$0xf]
  %v347 = vld [vmem:[%s2 + $0x3c] sm:$0xf]
  %v348 = vld [vmem:[%s3 + $0x1] sm:$0x1]
  %v349 = vperm.slane %v348, 0
  %v366 = vunpack.c.l.b16 %v332
  %v367 = vunpack.c.l.b16 %v333
  %v368 = vunpack.c.l.b16 %v334
  %v369 = vunpack.c.l.b16 %v335
  %v370 = vunpack.c.l.b16 %v336
  %v371 = vunpack.c.l.b16 %v337
  %v372 = vunpack.c.l.b16 %v338
  %v373 = vunpack.c.l.b16 %v339
  %v374 = vunpack.c.l.b16 %v340
  %v375 = vunpack.c.l.b16 %v341
  %v376 = vunpack.c.l.b16 %v342
  %v377 = vunpack.c.l.b16 %v343
  %v378 = vunpack.c.l.b16 %v344
  %v379 = vunpack.c.l.b16 %v345
  %v380 = vunpack.c.l.b16 %v346
  %v381 = vunpack.c.l.b16 %v347
  %v382 = vpack.c.b16 %v367, %v366
  %v383 = vpack.c.b16 %v369, %v368
  %v384 = vpack.c.b16 %v371, %v370
  %v385 = vpack.c.b16 %v373, %v372
  %v386 = vpack.c.b16 %v375, %v374
  %v387 = vpack.c.b16 %v377, %v376
  %v388 = vpack.c.b16 %v379, %v378
  %v389 = vpack.c.b16 %v381, %v380
  %398 = vmatpush.bf16.msra.mxu0 %v389
  %399 = vmatpush.bf16.msra.mxu0 %v388
  %400 = vmatpush.bf16.msra.mxu0 %v387
  %401 = vmatpush.bf16.msra.mxu0 %v386
  %402 = vmatpush.bf16.msra.mxu0 %v385
  %403 = vmatpush.bf16.msra.mxu0 %v384
  %404 = vmatpush.bf16.msra.mxu0 %v383
  %405 = vmatpush.bf16.msra.mxu0 %v382
  %406 = vmatmul.bf16.gmra.mxu0 %v316
  %v407 = vpop.f32.mrf.mxu0
  %v408 = vadd.f32 %v349, %v407
  %v409 = vpop.f32.mrf.mxu0
  %v410 = vadd.f32 %v349, %v409
  %411 = vmatmul.bf16.gmra.mxu0 %v317
  %v412 = vpop.f32.mrf.mxu0
  %v413 = vadd.f32 %v349, %v412
  %v414 = vpop.f32.mrf.mxu0
  %v415 = vadd.f32 %v349, %v414
  %416 = vmatmul.bf16.gmra.mxu0 %v318
  %v417 = vpop.f32.mrf.mxu0
  %v418 = vadd.f32 %v349, %v417
  %v419 = vpop.f32.mrf.mxu0
  %v420 = vadd.f32 %v349, %v419
  %421 = vmatmul.bf16.gmra.mxu0 %v319
  %v422 = vpop.f32.mrf.mxu0
  %v423 = vadd.f32 %v349, %v422
  %v424 = vpop.f32.mrf.mxu0
  %v425 = vadd.f32 %v349, %v424
  %426 = vmatmul.bf16.gmra.mxu0 %v320
  %v427 = vpop.f32.mrf.mxu0
  %v428 = vadd.f32 %v349, %v427
  %v429 = vpop.f32.mrf.mxu0
  %v430 = vadd.f32 %v349, %v429
  %431 = vmatmul.bf16.gmra.mxu0 %v321
  %v432 = vpop.f32.mrf.mxu0
  %v433 = vadd.f32 %v349, %v432
  %v434 = vpop.f32.mrf.mxu0
  %v435 = vadd.f32 %v349, %v434
  %436 = vmatmul.bf16.gmra.mxu0 %v322
  %v437 = vpop.f32.mrf.mxu0
  %v438 = vadd.f32 %v349, %v437
  %v439 = vpop.f32.mrf.mxu0
  %v440 = vadd.f32 %v349, %v439
  %441 = vmatmul.bf16.gmra.mxu0 %v323
  %v442 = vpop.f32.mrf.mxu0
  %v443 = vadd.f32 %v349, %v442
  %v444 = vpop.f32.mrf.mxu0
  %v445 = vadd.f32 %v349, %v444
  %446 = vmatmul.bf16.gmra.mxu0 %v324
  %v447 = vpop.f32.mrf.mxu0
  %v448 = vadd.f32 %v349, %v447
  %v449 = vpop.f32.mrf.mxu0
  %v450 = vadd.f32 %v349, %v449
  %451 = vmatmul.bf16.gmra.mxu0 %v325
  %v452 = vpop.f32.mrf.mxu0
  %v453 = vadd.f32 %v349, %v452
  %v454 = vpop.f32.mrf.mxu0
  %v455 = vadd.f32 %v349, %v454
  %456 = vmatmul.bf16.gmra.mxu0 %v326
  %v457 = vpop.f32.mrf.mxu0
  %v458 = vadd.f32 %v349, %v457
  %v459 = vpop.f32.mrf.mxu0
  %v460 = vadd.f32 %v349, %v459
  %461 = vmatmul.bf16.gmra.mxu0 %v327
  %v462 = vpop.f32.mrf.mxu0
  %v463 = vadd.f32 %v349, %v462
  %v464 = vpop.f32.mrf.mxu0
  %v465 = vadd.f32 %v349, %v464
  %466 = vmatmul.bf16.gmra.mxu0 %v328
  %v467 = vpop.f32.mrf.mxu0
  %v468 = vadd.f32 %v349, %v467
  %v469 = vpop.f32.mrf.mxu0
  %v470 = vadd.f32 %v349, %v469
  %471 = vmatmul.bf16.gmra.mxu0 %v329
  %v472 = vpop.f32.mrf.mxu0
  %v473 = vadd.f32 %v349, %v472
  %v474 = vpop.f32.mrf.mxu0
  %v475 = vadd.f32 %v349, %v474
  %476 = vmatmul.bf16.gmra.mxu0 %v330
  %v477 = vpop.f32.mrf.mxu0
  %v478 = vadd.f32 %v349, %v477
  %v479 = vpop.f32.mrf.mxu0
  %v480 = vadd.f32 %v349, %v479
  %481 = vmatmul.bf16.gmra.mxu0 %v331
  %v482 = vpop.f32.mrf.mxu0
  %v483 = vadd.f32 %v349, %v482
  %v484 = vpop.f32.mrf.mxu0
  %v485 = vadd.f32 %v349, %v484
  %486 = vdwg.mxu0
  %vm487 = vcmp.gt.f32.partialorder %v408, 0.0
  %vm488 = vcmp.gt.f32.partialorder %v410, 0.0
  %vm489 = vcmp.gt.f32.partialorder %v413, 0.0
  %vm490 = vcmp.gt.f32.partialorder %v415, 0.0
  %vm491 = vcmp.gt.f32.partialorder %v418, 0.0
  %vm492 = vcmp.gt.f32.partialorder %v420, 0.0
  %vm493 = vcmp.gt.f32.partialorder %v423, 0.0
  %vm494 = vcmp.gt.f32.partialorder %v425, 0.0
  %vm495 = vcmp.gt.f32.partialorder %v428, 0.0
  %vm496 = vcmp.gt.f32.partialorder %v430, 0.0
  %vm497 = vcmp.gt.f32.partialorder %v433, 0.0
  %vm498 = vcmp.gt.f32.partialorder %v435, 0.0
  %vm499 = vcmp.gt.f32.partialorder %v438, 0.0
  %vm500 = vcmp.gt.f32.partialorder %v440, 0.0
  %vm501 = vcmp.gt.f32.partialorder %v443, 0.0
  %vm502 = vcmp.gt.f32.partialorder %v445, 0.0
  %vm503 = vcmp.gt.f32.partialorder %v448, 0.0
  %vm504 = vcmp.gt.f32.partialorder %v450, 0.0
  %vm505 = vcmp.gt.f32.partialorder %v453, 0.0
  %vm506 = vcmp.gt.f32.partialorder %v455, 0.0
  %vm507 = vcmp.gt.f32.partialorder %v458, 0.0
  %vm508 = vcmp.gt.f32.partialorder %v460, 0.0
  %vm509 = vcmp.gt.f32.partialorder %v463, 0.0
  %vm510 = vcmp.gt.f32.partialorder %v465, 0.0
  %vm511 = vcmp.gt.f32.partialorder %v468, 0.0
  %vm512 = vcmp.gt.f32.partialorder %v470, 0.0
  %vm513 = vcmp.gt.f32.partialorder %v473, 0.0
  %vm514 = vcmp.gt.f32.partialorder %v475, 0.0
  %vm515 = vcmp.gt.f32.partialorder %v478, 0.0
  %vm516 = vcmp.gt.f32.partialorder %v480, 0.0
  %vm517 = vcmp.gt.f32.partialorder %v483, 0.0
  %vm518 = vcmp.gt.f32.partialorder %v485, 0.0
  %v519 = vmul.f32 %v408, 0.01
  %v520 = vmul.f32 %v410, 0.01
  %v521 = vmul.f32 %v413, 0.01
  %v522 = vmul.f32 %v415, 0.01
  %v523 = vmul.f32 %v418, 0.01
  %v524 = vmul.f32 %v420, 0.01
  %v525 = vmul.f32 %v423, 0.01
  %v526 = vmul.f32 %v425, 0.01
  %v527 = vmul.f32 %v428, 0.01
  %v528 = vmul.f32 %v430, 0.01
  %v529 = vmul.f32 %v433, 0.01
  %v530 = vmul.f32 %v435, 0.01
  %v531 = vmul.f32 %v438, 0.01
  %v532 = vmul.f32 %v440, 0.01
  %v533 = vmul.f32 %v443, 0.01
  %v534 = vmul.f32 %v445, 0.01
  %v535 = vmul.f32 %v448, 0.01
  %v536 = vmul.f32 %v450, 0.01
  %v537 = vmul.f32 %v453, 0.01
  %v538 = vmul.f32 %v455, 0.01
  %v539 = vmul.f32 %v458, 0.01
  %v540 = vmul.f32 %v460, 0.01
  %v541 = vmul.f32 %v463, 0.01
  %v542 = vmul.f32 %v465, 0.01
  %v543 = vmul.f32 %v468, 0.01
  %v544 = vmul.f32 %v470, 0.01
  %v545 = vmul.f32 %v473, 0.01
  %v546 = vmul.f32 %v475, 0.01
  %v547 = vmul.f32 %v478, 0.01
  %v548 = vmul.f32 %v480, 0.01
  %v549 = vmul.f32 %v483, 0.01
  %v550 = vmul.f32 %v485, 0.01
  %v551 = vsel %vm487, %v408, %v519
  %v552 = vsel %vm488, %v410, %v520
  %v553 = vsel %vm489, %v413, %v521
  %v554 = vsel %vm490, %v415, %v522
  %v555 = vsel %vm491, %v418, %v523
  %v556 = vsel %vm492, %v420, %v524
  %v557 = vsel %vm493, %v423, %v525
  %v558 = vsel %vm494, %v425, %v526
  %v559 = vsel %vm495, %v428, %v527
  %v560 = vsel %vm496, %v430, %v528
  %v561 = vsel %vm497, %v433, %v529
  %v562 = vsel %vm498, %v435, %v530
  %v563 = vsel %vm499, %v438, %v531
  %v564 = vsel %vm500, %v440, %v532
  %v565 = vsel %vm501, %v443, %v533
  %v566 = vsel %vm502, %v445, %v534
  %v567 = vsel %vm503, %v448, %v535
  %v568 = vsel %vm504, %v450, %v536
  %v569 = vsel %vm505, %v453, %v537
  %v570 = vsel %vm506, %v455, %v538
  %v571 = vsel %vm507, %v458, %v539
  %v572 = vsel %vm508, %v460, %v540
  %v573 = vsel %vm509, %v463, %v541
  %v574 = vsel %vm510, %v465, %v542
  %v575 = vsel %vm511, %v468, %v543
  %v576 = vsel %vm512, %v470, %v544
  %v577 = vsel %vm513, %v473, %v545
  %v578 = vsel %vm514, %v475, %v546
  %v579 = vsel %vm515, %v478, %v547
  %v580 = vsel %vm516, %v480, %v548
  %v581 = vsel %vm517, %v483, %v549
  %v582 = vsel %vm518, %v485, %v550
  %v583 = vpack.c.bf16 %v552, %v551
  %v584 = vpack.c.bf16 %v554, %v553
  %v585 = vpack.c.bf16 %v556, %v555
  %v586 = vpack.c.bf16 %v558, %v557
  %v587 = vpack.c.bf16 %v560, %v559
  %v588 = vpack.c.bf16 %v562, %v561
  %v589 = vpack.c.bf16 %v564, %v563
  %v590 = vpack.c.bf16 %v566, %v565
  %v591 = vpack.c.bf16 %v568, %v567
  %v592 = vpack.c.bf16 %v570, %v569
  %v593 = vpack.c.bf16 %v572, %v571
  %v594 = vpack.c.bf16 %v574, %v573
  %v595 = vpack.c.bf16 %v576, %v575
  %v596 = vpack.c.bf16 %v578, %v577
  %v597 = vpack.c.bf16 %v580, %v579
  %v598 = vpack.c.bf16 %v582, %v581
  %s599 = scalar_lea.vmem %s2, 64
  %v600 = vld [vmem:[%s599] sm:$0xf]
  %v601 = vld [vmem:[%s599 + $0x4] sm:$0xf]
  %v602 = vld [vmem:[%s599 + $0x8] sm:$0xf]
  %v603 = vld [vmem:[%s599 + $0xc] sm:$0xf]
  %v604 = vld [vmem:[%s599 + $0x10] sm:$0xf]
  %v605 = vld [vmem:[%s599 + $0x14] sm:$0xf]
  %v606 = vld [vmem:[%s599 + $0x18] sm:$0xf]
  %v607 = vld [vmem:[%s599 + $0x1c] sm:$0xf]
  %v608 = vld [vmem:[%s599 + $0x20] sm:$0xf]
  %v609 = vld [vmem:[%s599 + $0x24] sm:$0xf]
  %v610 = vld [vmem:[%s599 + $0x28] sm:$0xf]
  %v611 = vld [vmem:[%s599 + $0x2c] sm:$0xf]
  %v612 = vld [vmem:[%s599 + $0x30] sm:$0xf]
  %v613 = vld [vmem:[%s599 + $0x34] sm:$0xf]
  %v614 = vld [vmem:[%s599 + $0x38] sm:$0xf]
  %v615 = vld [vmem:[%s599 + $0x3c] sm:$0xf]
  %v616 = vld [vmem:[%s3 + $0x2] sm:$0x1]
  %v617 = vperm.slane %v616, 0
  %v634 = vunpack.c.l.b16 %v600
  %v635 = vunpack.c.l.b16 %v601
  %v636 = vunpack.c.l.b16 %v602
  %v637 = vunpack.c.l.b16 %v603
  %v638 = vunpack.c.l.b16 %v604
  %v639 = vunpack.c.l.b16 %v605
  %v640 = vunpack.c.l.b16 %v606
  %v641 = vunpack.c.l.b16 %v607
  %v642 = vunpack.c.l.b16 %v608
  %v643 = vunpack.c.l.b16 %v609
  %v644 = vunpack.c.l.b16 %v610
  %v645 = vunpack.c.l.b16 %v611
  %v646 = vunpack.c.l.b16 %v612
  %v647 = vunpack.c.l.b16 %v613
  %v648 = vunpack.c.l.b16 %v614
  %v649 = vunpack.c.l.b16 %v615
  %v650 = vpack.c.b16 %v635, %v634
  %v651 = vpack.c.b16 %v637, %v636
  %v652 = vpack.c.b16 %v639, %v638
  %v653 = vpack.c.b16 %v641, %v640
  %v654 = vpack.c.b16 %v643, %v642
  %v655 = vpack.c.b16 %v645, %v644
  %v656 = vpack.c.b16 %v647, %v646
  %v657 = vpack.c.b16 %v649, %v648
  %666 = vmatpush.bf16.msra.mxu0 %v657
  %667 = vmatpush.bf16.msra.mxu0 %v656
  %668 = vmatpush.bf16.msra.mxu0 %v655
  %669 = vmatpush.bf16.msra.mxu0 %v654
  %670 = vmatpush.bf16.msra.mxu0 %v653
  %671 = vmatpush.bf16.msra.mxu0 %v652
  %672 = vmatpush.bf16.msra.mxu0 %v651
  %673 = vmatpush.bf16.msra.mxu0 %v650
  %674 = vmatmul.bf16.gmra.mxu0 %v583
  %v675 = vpop.f32.mrf.mxu0
  %v676 = vadd.f32 %v617, %v675
  %v677 = vpop.f32.mrf.mxu0
  %v678 = vadd.f32 %v617, %v677
  %679 = vmatmul.bf16.gmra.mxu0 %v584
  %v680 = vpop.f32.mrf.mxu0
  %v681 = vadd.f32 %v617, %v680
  %v682 = vpop.f32.mrf.mxu0
  %v683 = vadd.f32 %v617, %v682
  %684 = vmatmul.bf16.gmra.mxu0 %v585
  %v685 = vpop.f32.mrf.mxu0
  %v686 = vadd.f32 %v617, %v685
  %v687 = vpop.f32.mrf.mxu0
  %v688 = vadd.f32 %v617, %v687
  %689 = vmatmul.bf16.gmra.mxu0 %v586
  %v690 = vpop.f32.mrf.mxu0
  %v691 = vadd.f32 %v617, %v690
  %v692 = vpop.f32.mrf.mxu0
  %v693 = vadd.f32 %v617, %v692
  %694 = vmatmul.bf16.gmra.mxu0 %v587
  %v695 = vpop.f32.mrf.mxu0
  %v696 = vadd.f32 %v617, %v695
  %v697 = vpop.f32.mrf.mxu0
  %v698 = vadd.f32 %v617, %v697
  %699 = vmatmul.bf16.gmra.mxu0 %v588
  %v700 = vpop.f32.mrf.mxu0
  %v701 = vadd.f32 %v617, %v700
  %v702 = vpop.f32.mrf.mxu0
  %v703 = vadd.f32 %v617, %v702
  %704 = vmatmul.bf16.gmra.mxu0 %v589
  %v705 = vpop.f32.mrf.mxu0
  %v706 = vadd.f32 %v617, %v705
  %v707 = vpop.f32.mrf.mxu0
  %v708 = vadd.f32 %v617, %v707
  %709 = vmatmul.bf16.gmra.mxu0 %v590
  %v710 = vpop.f32.mrf.mxu0
  %v711 = vadd.f32 %v617, %v710
  %v712 = vpop.f32.mrf.mxu0
  %v713 = vadd.f32 %v617, %v712
  %714 = vmatmul.bf16.gmra.mxu0 %v591
  %v715 = vpop.f32.mrf.mxu0
  %v716 = vadd.f32 %v617, %v715
  %v717 = vpop.f32.mrf.mxu0
  %v718 = vadd.f32 %v617, %v717
  %719 = vmatmul.bf16.gmra.mxu0 %v592
  %v720 = vpop.f32.mrf.mxu0
  %v721 = vadd.f32 %v617, %v720
  %v722 = vpop.f32.mrf.mxu0
  %v723 = vadd.f32 %v617, %v722
  %724 = vmatmul.bf16.gmra.mxu0 %v593
  %v725 = vpop.f32.mrf.mxu0
  %v726 = vadd.f32 %v617, %v725
  %v727 = vpop.f32.mrf.mxu0
  %v728 = vadd.f32 %v617, %v727
  %729 = vmatmul.bf16.gmra.mxu0 %v594
  %v730 = vpop.f32.mrf.mxu0
  %v731 = vadd.f32 %v617, %v730
  %v732 = vpop.f32.mrf.mxu0
  %v733 = vadd.f32 %v617, %v732
  %734 = vmatmul.bf16.gmra.mxu0 %v595
  %v735 = vpop.f32.mrf.mxu0
  %v736 = vadd.f32 %v617, %v735
  %v737 = vpop.f32.mrf.mxu0
  %v738 = vadd.f32 %v617, %v737
  %739 = vmatmul.bf16.gmra.mxu0 %v596
  %v740 = vpop.f32.mrf.mxu0
  %v741 = vadd.f32 %v617, %v740
  %v742 = vpop.f32.mrf.mxu0
  %v743 = vadd.f32 %v617, %v742
  %744 = vmatmul.bf16.gmra.mxu0 %v597
  %v745 = vpop.f32.mrf.mxu0
  %v746 = vadd.f32 %v617, %v745
  %v747 = vpop.f32.mrf.mxu0
  %v748 = vadd.f32 %v617, %v747
  %749 = vmatmul.bf16.gmra.mxu0 %v598
  %v750 = vpop.f32.mrf.mxu0
  %v751 = vadd.f32 %v617, %v750
  %v752 = vpop.f32.mrf.mxu0
  %v753 = vadd.f32 %v617, %v752
  %754 = vdwg.mxu0
  %vm755 = vcmp.gt.f32.partialorder %v676, 0.0
  %vm756 = vcmp.gt.f32.partialorder %v678, 0.0
  %vm757 = vcmp.gt.f32.partialorder %v681, 0.0
  %vm758 = vcmp.gt.f32.partialorder %v683, 0.0
  %vm759 = vcmp.gt.f32.partialorder %v686, 0.0
  %vm760 = vcmp.gt.f32.partialorder %v688, 0.0
  %vm761 = vcmp.gt.f32.partialorder %v691, 0.0
  %vm762 = vcmp.gt.f32.partialorder %v693, 0.0
  %vm763 = vcmp.gt.f32.partialorder %v696, 0.0
  %vm764 = vcmp.gt.f32.partialorder %v698, 0.0
  %vm765 = vcmp.gt.f32.partialorder %v701, 0.0
  %vm766 = vcmp.gt.f32.partialorder %v703, 0.0
  %vm767 = vcmp.gt.f32.partialorder %v706, 0.0
  %vm768 = vcmp.gt.f32.partialorder %v708, 0.0
  %vm769 = vcmp.gt.f32.partialorder %v711, 0.0
  %vm770 = vcmp.gt.f32.partialorder %v713, 0.0
  %vm771 = vcmp.gt.f32.partialorder %v716, 0.0
  %vm772 = vcmp.gt.f32.partialorder %v718, 0.0
  %vm773 = vcmp.gt.f32.partialorder %v721, 0.0
  %vm774 = vcmp.gt.f32.partialorder %v723, 0.0
  %vm775 = vcmp.gt.f32.partialorder %v726, 0.0
  %vm776 = vcmp.gt.f32.partialorder %v728, 0.0
  %vm777 = vcmp.gt.f32.partialorder %v731, 0.0
  %vm778 = vcmp.gt.f32.partialorder %v733, 0.0
  %vm779 = vcmp.gt.f32.partialorder %v736, 0.0
  %vm780 = vcmp.gt.f32.partialorder %v738, 0.0
  %vm781 = vcmp.gt.f32.partialorder %v741, 0.0
  %vm782 = vcmp.gt.f32.partialorder %v743, 0.0
  %vm783 = vcmp.gt.f32.partialorder %v746, 0.0
  %vm784 = vcmp.gt.f32.partialorder %v748, 0.0
  %vm785 = vcmp.gt.f32.partialorder %v751, 0.0
  %vm786 = vcmp.gt.f32.partialorder %v753, 0.0
  %v787 = vmul.f32 %v676, 0.01
  %v788 = vmul.f32 %v678, 0.01
  %v789 = vmul.f32 %v681, 0.01
  %v790 = vmul.f32 %v683, 0.01
  %v791 = vmul.f32 %v686, 0.01
  %v792 = vmul.f32 %v688, 0.01
  %v793 = vmul.f32 %v691, 0.01
  %v794 = vmul.f32 %v693, 0.01
  %v795 = vmul.f32 %v696, 0.01
  %v796 = vmul.f32 %v698, 0.01
  %v797 = vmul.f32 %v701, 0.01
  %v798 = vmul.f32 %v703, 0.01
  %v799 = vmul.f32 %v706, 0.01
  %v800 = vmul.f32 %v708, 0.01
  %v801 = vmul.f32 %v711, 0.01
  %v802 = vmul.f32 %v713, 0.01
  %v803 = vmul.f32 %v716, 0.01
  %v804 = vmul.f32 %v718, 0.01
  %v805 = vmul.f32 %v721, 0.01
  %v806 = vmul.f32 %v723, 0.01
  %v807 = vmul.f32 %v726, 0.01
  %v808 = vmul.f32 %v728, 0.01
  %v809 = vmul.f32 %v731, 0.01
  %v810 = vmul.f32 %v733, 0.01
  %v811 = vmul.f32 %v736, 0.01
  %v812 = vmul.f32 %v738, 0.01
  %v813 = vmul.f32 %v741, 0.01
  %v814 = vmul.f32 %v743, 0.01
  %v815 = vmul.f32 %v746, 0.01
  %v816 = vmul.f32 %v748, 0.01
  %v817 = vmul.f32 %v751, 0.01
  %v818 = vmul.f32 %v753, 0.01
  %v819 = vsel %vm755, %v676, %v787
  %v820 = vsel %vm756, %v678, %v788
  %v821 = vsel %vm757, %v681, %v789
  %v822 = vsel %vm758, %v683, %v790
  %v823 = vsel %vm759, %v686, %v791
  %v824 = vsel %vm760, %v688, %v792
  %v825 = vsel %vm761, %v691, %v793
  %v826 = vsel %vm762, %v693, %v794
  %v827 = vsel %vm763, %v696, %v795
  %v828 = vsel %vm764, %v698, %v796
  %v829 = vsel %vm765, %v701, %v797
  %v830 = vsel %vm766, %v703, %v798
  %v831 = vsel %vm767, %v706, %v799
  %v832 = vsel %vm768, %v708, %v800
  %v833 = vsel %vm769, %v711, %v801
  %v834 = vsel %vm770, %v713, %v802
  %v835 = vsel %vm771, %v716, %v803
  %v836 = vsel %vm772, %v718, %v804
  %v837 = vsel %vm773, %v721, %v805
  %v838 = vsel %vm774, %v723, %v806
  %v839 = vsel %vm775, %v726, %v807
  %v840 = vsel %vm776, %v728, %v808
  %v841 = vsel %vm777, %v731, %v809
  %v842 = vsel %vm778, %v733, %v810
  %v843 = vsel %vm779, %v736, %v811
  %v844 = vsel %vm780, %v738, %v812
  %v845 = vsel %vm781, %v741, %v813
  %v846 = vsel %vm782, %v743, %v814
  %v847 = vsel %vm783, %v746, %v815
  %v848 = vsel %vm784, %v748, %v816
  %v849 = vsel %vm785, %v751, %v817
  %v850 = vsel %vm786, %v753, %v818
  %v851 = vpack.c.bf16 %v820, %v819
  %v852 = vpack.c.bf16 %v822, %v821
  %v853 = vpack.c.bf16 %v824, %v823
  %v854 = vpack.c.bf16 %v826, %v825
  %v855 = vpack.c.bf16 %v828, %v827
  %v856 = vpack.c.bf16 %v830, %v829
  %v857 = vpack.c.bf16 %v832, %v831
  %v858 = vpack.c.bf16 %v834, %v833
  %v859 = vpack.c.bf16 %v836, %v835
  %v860 = vpack.c.bf16 %v838, %v837
  %v861 = vpack.c.bf16 %v840, %v839
  %v862 = vpack.c.bf16 %v842, %v841
  %v863 = vpack.c.bf16 %v844, %v843
  %v864 = vpack.c.bf16 %v846, %v845
  %v865 = vpack.c.bf16 %v848, %v847
  %v866 = vpack.c.bf16 %v850, %v849
  %v867 = vld [vmem:[%s4] sm:$0xf]
  %v868 = vld [vmem:[%s4 + $0x4] sm:$0xf]
  %v869 = vld [vmem:[%s4 + $0x8] sm:$0xf]
  %v870 = vld [vmem:[%s4 + $0xc] sm:$0xf]
  %v871 = vld [vmem:[%s4 + $0x10] sm:$0xf]
  %v872 = vld [vmem:[%s4 + $0x14] sm:$0xf]
  %v873 = vld [vmem:[%s4 + $0x18] sm:$0xf]
  %v874 = vld [vmem:[%s4 + $0x1c] sm:$0xf]
  %v875 = vld [vmem:[%s4 + $0x20] sm:$0xf]
  %v876 = vld [vmem:[%s4 + $0x24] sm:$0xf]
  %v877 = vld [vmem:[%s4 + $0x28] sm:$0xf]
  %v878 = vld [vmem:[%s4 + $0x2c] sm:$0xf]
  %v879 = vld [vmem:[%s4 + $0x30] sm:$0xf]
  %v880 = vld [vmem:[%s4 + $0x34] sm:$0xf]
  %v881 = vld [vmem:[%s4 + $0x38] sm:$0xf]
  %v882 = vld [vmem:[%s4 + $0x3c] sm:$0xf]
  %v883 = vld [vmem:[%s5] sm:$0x1]
  %v885 = vperm.slane %v883, 0
  %v903 = vunpack.c.l.b16 %v867
  %v904 = vunpack.c.l.b16 %v868
  %v905 = vunpack.c.l.b16 %v869
  %v906 = vunpack.c.l.b16 %v870
  %v907 = vunpack.c.l.b16 %v871
  %v908 = vunpack.c.l.b16 %v872
  %v909 = vunpack.c.l.b16 %v873
  %v910 = vunpack.c.l.b16 %v874
  %v911 = vunpack.c.l.b16 %v875
  %v912 = vunpack.c.l.b16 %v876
  %v913 = vunpack.c.l.b16 %v877
  %v914 = vunpack.c.l.b16 %v878
  %v915 = vunpack.c.l.b16 %v879
  %v916 = vunpack.c.l.b16 %v880
  %v917 = vunpack.c.l.b16 %v881
  %v918 = vunpack.c.l.b16 %v882
  %v919 = vpack.c.b16 %v904, %v903
  %v920 = vpack.c.b16 %v906, %v905
  %v921 = vpack.c.b16 %v908, %v907
  %v922 = vpack.c.b16 %v910, %v909
  %v923 = vpack.c.b16 %v912, %v911
  %v924 = vpack.c.b16 %v914, %v913
  %v925 = vpack.c.b16 %v916, %v915
  %v926 = vpack.c.b16 %v918, %v917
  %935 = vmatpush.bf16.msra.mxu0 %v926
  %936 = vmatpush.bf16.msra.mxu0 %v925
  %937 = vmatpush.bf16.msra.mxu0 %v924
  %938 = vmatpush.bf16.msra.mxu0 %v923
  %939 = vmatpush.bf16.msra.mxu0 %v922
  %940 = vmatpush.bf16.msra.mxu0 %v921
  %941 = vmatpush.bf16.msra.mxu0 %v920
  %942 = vmatpush.bf16.msra.mxu0 %v919
  %943 = vmatmul.bf16.gmra.mxu0 %v851
  %v944 = vpop.f32.mrf.mxu0
  %v945 = vadd.f32 %v885, %v944
  %v946 = vpop.f32.mrf.mxu0
  %v947 = vadd.f32 %v885, %v946
  %948 = vmatmul.bf16.gmra.mxu0 %v852
  %v949 = vpop.f32.mrf.mxu0
  %v950 = vadd.f32 %v885, %v949
  %v951 = vpop.f32.mrf.mxu0
  %v952 = vadd.f32 %v885, %v951
  %953 = vmatmul.bf16.gmra.mxu0 %v853
  %v954 = vpop.f32.mrf.mxu0
  %v955 = vadd.f32 %v885, %v954
  %v956 = vpop.f32.mrf.mxu0
  %v957 = vadd.f32 %v885, %v956
  %958 = vmatmul.bf16.gmra.mxu0 %v854
  %v959 = vpop.f32.mrf.mxu0
  %v960 = vadd.f32 %v885, %v959
  %v961 = vpop.f32.mrf.mxu0
  %v962 = vadd.f32 %v885, %v961
  %963 = vmatmul.bf16.gmra.mxu0 %v855
  %v964 = vpop.f32.mrf.mxu0
  %v965 = vadd.f32 %v885, %v964
  %v966 = vpop.f32.mrf.mxu0
  %v967 = vadd.f32 %v885, %v966
  %968 = vmatmul.bf16.gmra.mxu0 %v856
  %v969 = vpop.f32.mrf.mxu0
  %v970 = vadd.f32 %v885, %v969
  %v971 = vpop.f32.mrf.mxu0
  %v972 = vadd.f32 %v885, %v971
  %973 = vmatmul.bf16.gmra.mxu0 %v857
  %v974 = vpop.f32.mrf.mxu0
  %v975 = vadd.f32 %v885, %v974
  %v976 = vpop.f32.mrf.mxu0
  %v977 = vadd.f32 %v885, %v976
  %978 = vmatmul.bf16.gmra.mxu0 %v858
  %v979 = vpop.f32.mrf.mxu0
  %v980 = vadd.f32 %v885, %v979
  %v981 = vpop.f32.mrf.mxu0
  %v982 = vadd.f32 %v885, %v981
  %983 = vmatmul.bf16.gmra.mxu0 %v859
  %v984 = vpop.f32.mrf.mxu0
  %v985 = vadd.f32 %v885, %v984
  %v986 = vpop.f32.mrf.mxu0
  %v987 = vadd.f32 %v885, %v986
  %988 = vmatmul.bf16.gmra.mxu0 %v860
  %v989 = vpop.f32.mrf.mxu0
  %v990 = vadd.f32 %v885, %v989
  %v991 = vpop.f32.mrf.mxu0
  %v992 = vadd.f32 %v885, %v991
  %993 = vmatmul.bf16.gmra.mxu0 %v861
  %v994 = vpop.f32.mrf.mxu0
  %v995 = vadd.f32 %v885, %v994
  %v996 = vpop.f32.mrf.mxu0
  %v997 = vadd.f32 %v885, %v996
  %998 = vmatmul.bf16.gmra.mxu0 %v862
  %v999 = vpop.f32.mrf.mxu0
  %v1000 = vadd.f32 %v885, %v999
  %v1001 = vpop.f32.mrf.mxu0
  %v1002 = vadd.f32 %v885, %v1001
  %1003 = vmatmul.bf16.gmra.mxu0 %v863
  %v1004 = vpop.f32.mrf.mxu0
  %v1005 = vadd.f32 %v885, %v1004
  %v1006 = vpop.f32.mrf.mxu0
  %v1007 = vadd.f32 %v885, %v1006
  %1008 = vmatmul.bf16.gmra.mxu0 %v864
  %v1009 = vpop.f32.mrf.mxu0
  %v1010 = vadd.f32 %v885, %v1009
  %v1011 = vpop.f32.mrf.mxu0
  %v1012 = vadd.f32 %v885, %v1011
  %1013 = vmatmul.bf16.gmra.mxu0 %v865
  %v1014 = vpop.f32.mrf.mxu0
  %v1015 = vadd.f32 %v885, %v1014
  %v1016 = vpop.f32.mrf.mxu0
  %v1017 = vadd.f32 %v885, %v1016
  %1018 = vmatmul.bf16.gmra.mxu0 %v866
  %v1019 = vpop.f32.mrf.mxu0
  %v1020 = vadd.f32 %v885, %v1019
  %v1021 = vpop.f32.mrf.mxu0
  %v1022 = vadd.f32 %v885, %v1021
  %1023 = vdwg.mxu0
  %v1024 = vsub.f32 0.0, %v945
  %v1025 = vsub.f32 0.0, %v947
  %v1026 = vsub.f32 0.0, %v950
  %v1027 = vsub.f32 0.0, %v952
  %v1028 = vsub.f32 0.0, %v955
  %v1029 = vsub.f32 0.0, %v957
  %v1030 = vsub.f32 0.0, %v960
  %v1031 = vsub.f32 0.0, %v962
  %v1032 = vsub.f32 0.0, %v965
  %v1033 = vsub.f32 0.0, %v967
  %v1034 = vsub.f32 0.0, %v970
  %v1035 = vsub.f32 0.0, %v972
  %v1036 = vsub.f32 0.0, %v975
  %v1037 = vsub.f32 0.0, %v977
  %v1038 = vsub.f32 0.0, %v980
  %v1039 = vsub.f32 0.0, %v982
  %v1040 = vsub.f32 0.0, %v985
  %v1041 = vsub.f32 0.0, %v987
  %v1042 = vsub.f32 0.0, %v990
  %v1043 = vsub.f32 0.0, %v992
  %v1044 = vsub.f32 0.0, %v995
  %v1045 = vsub.f32 0.0, %v997
  %v1046 = vsub.f32 0.0, %v1000
  %v1047 = vsub.f32 0.0, %v1002
  %v1048 = vsub.f32 0.0, %v1005
  %v1049 = vsub.f32 0.0, %v1007
  %v1050 = vsub.f32 0.0, %v1010
  %v1051 = vsub.f32 0.0, %v1012
  %v1052 = vsub.f32 0.0, %v1015
  %v1053 = vsub.f32 0.0, %v1017
  %v1054 = vsub.f32 0.0, %v1020
  %v1055 = vsub.f32 0.0, %v1022
  %v1056 = vmul.f32 %v1024, 1.442695
  %v1057 = vpow.pop %v1056
  %v1058 = vmul.f32 %v1025, 1.442695
  %v1059 = vpow.pop %v1058
  %v1060 = vmul.f32 %v1026, 1.442695
  %v1061 = vpow.pop %v1060
  %v1062 = vmul.f32 %v1027, 1.442695
  %v1063 = vpow.pop %v1062
  %v1064 = vmul.f32 %v1028, 1.442695
  %v1065 = vpow.pop %v1064
  %v1066 = vmul.f32 %v1029, 1.442695
  %v1067 = vpow.pop %v1066
  %v1068 = vmul.f32 %v1030, 1.442695
  %v1069 = vpow.pop %v1068
  %v1070 = vmul.f32 %v1031, 1.442695
  %v1071 = vpow.pop %v1070
  %v1072 = vmul.f32 %v1032, 1.442695
  %v1073 = vpow.pop %v1072
  %v1074 = vmul.f32 %v1033, 1.442695
  %v1075 = vpow.pop %v1074
  %v1076 = vmul.f32 %v1034, 1.442695
  %v1077 = vpow.pop %v1076
  %v1078 = vmul.f32 %v1035, 1.442695
  %v1079 = vpow.pop %v1078
  %v1080 = vmul.f32 %v1036, 1.442695
  %v1081 = vpow.pop %v1080
  %v1082 = vmul.f32 %v1037, 1.442695
  %v1083 = vpow.pop %v1082
  %v1084 = vmul.f32 %v1038, 1.442695
  %v1085 = vpow.pop %v1084
  %v1086 = vmul.f32 %v1039, 1.442695
  %v1087 = vpow.pop %v1086
  %v1088 = vmul.f32 %v1040, 1.442695
  %v1089 = vpow.pop %v1088
  %v1090 = vmul.f32 %v1041, 1.442695
  %v1091 = vpow.pop %v1090
  %v1092 = vmul.f32 %v1042, 1.442695
  %v1093 = vpow.pop %v1092
  %v1094 = vmul.f32 %v1043, 1.442695
  %v1095 = vpow.pop %v1094
  %v1096 = vmul.f32 %v1044, 1.442695
  %v1097 = vpow.pop %v1096
  %v1098 = vmul.f32 %v1045, 1.442695
  %v1099 = vpow.pop %v1098
  %v1100 = vmul.f32 %v1046, 1.442695
  %v1101 = vpow.pop %v1100
  %v1102 = vmul.f32 %v1047, 1.442695
  %v1103 = vpow.pop %v1102
  %v1104 = vmul.f32 %v1048, 1.442695
  %v1105 = vpow.pop %v1104
  %v1106 = vmul.f32 %v1049, 1.442695
  %v1107 = vpow.pop %v1106
  %v1108 = vmul.f32 %v1050, 1.442695
  %v1109 = vpow.pop %v1108
  %v1110 = vmul.f32 %v1051, 1.442695
  %v1111 = vpow.pop %v1110
  %v1112 = vmul.f32 %v1052, 1.442695
  %v1113 = vpow.pop %v1112
  %v1114 = vmul.f32 %v1053, 1.442695
  %v1115 = vpow.pop %v1114
  %v1116 = vmul.f32 %v1054, 1.442695
  %v1117 = vpow.pop %v1116
  %v1118 = vmul.f32 %v1055, 1.442695
  %v1119 = vpow.pop %v1118
  %v1120 = vadd.f32 %v1057, 1.0
  %v1121 = vadd.f32 %v1059, 1.0
  %v1122 = vadd.f32 %v1061, 1.0
  %v1123 = vadd.f32 %v1063, 1.0
  %v1124 = vadd.f32 %v1065, 1.0
  %v1125 = vadd.f32 %v1067, 1.0
  %v1126 = vadd.f32 %v1069, 1.0
  %v1127 = vadd.f32 %v1071, 1.0
  %v1128 = vadd.f32 %v1073, 1.0
  %v1129 = vadd.f32 %v1075, 1.0
  %v1130 = vadd.f32 %v1077, 1.0
  %v1131 = vadd.f32 %v1079, 1.0
  %v1132 = vadd.f32 %v1081, 1.0
  %v1133 = vadd.f32 %v1083, 1.0
  %v1134 = vadd.f32 %v1085, 1.0
  %v1135 = vadd.f32 %v1087, 1.0
  %v1136 = vadd.f32 %v1089, 1.0
  %v1137 = vadd.f32 %v1091, 1.0
  %v1138 = vadd.f32 %v1093, 1.0
  %v1139 = vadd.f32 %v1095, 1.0
  %v1140 = vadd.f32 %v1097, 1.0
  %v1141 = vadd.f32 %v1099, 1.0
  %v1142 = vadd.f32 %v1101, 1.0
  %v1143 = vadd.f32 %v1103, 1.0
  %v1144 = vadd.f32 %v1105, 1.0
  %v1145 = vadd.f32 %v1107, 1.0
  %v1146 = vadd.f32 %v1109, 1.0
  %v1147 = vadd.f32 %v1111, 1.0
  %v1148 = vadd.f32 %v1113, 1.0
  %v1149 = vadd.f32 %v1115, 1.0
  %v1150 = vadd.f32 %v1117, 1.0
  %v1151 = vadd.f32 %v1119, 1.0
  %v1152 = vrcp.pop %v1120
  %v1153 = vrcp.pop %v1121
  %v1154 = vrcp.pop %v1122
  %v1155 = vrcp.pop %v1123
  %v1156 = vrcp.pop %v1124
  %v1157 = vrcp.pop %v1125
  %v1158 = vrcp.pop %v1126
  %v1159 = vrcp.pop %v1127
  %v1160 = vrcp.pop %v1128
  %v1161 = vrcp.pop %v1129
  %v1162 = vrcp.pop %v1130
  %v1163 = vrcp.pop %v1131
  %v1164 = vrcp.pop %v1132
  %v1165 = vrcp.pop %v1133
  %v1166 = vrcp.pop %v1134
  %v1167 = vrcp.pop %v1135
  %v1168 = vrcp.pop %v1136
  %v1169 = vrcp.pop %v1137
  %v1170 = vrcp.pop %v1138
  %v1171 = vrcp.pop %v1139
  %v1172 = vrcp.pop %v1140
  %v1173 = vrcp.pop %v1141
  %v1174 = vrcp.pop %v1142
  %v1175 = vrcp.pop %v1143
  %v1176 = vrcp.pop %v1144
  %v1177 = vrcp.pop %v1145
  %v1178 = vrcp.pop %v1146
  %v1179 = vrcp.pop %v1147
  %v1180 = vrcp.pop %v1148
  %v1181 = vrcp.pop %v1149
  %v1182 = vrcp.pop %v1150
  %v1183 = vrcp.pop %v1151
  %vm1184 = vcmask 64512
  %1185 = vst.msk [vmem:[%s6] sm:$0xff] %vm1184, %v1152
  %1186 = vst.msk [vmem:[%s6 + $0x8] sm:$0xff] %vm1184, %v1153
  %1187 = vst.msk [vmem:[%s6 + $0x10] sm:$0xff] %vm1184, %v1154
  %1188 = vst.msk [vmem:[%s6 + $0x18] sm:$0xff] %vm1184, %v1155
  %1189 = vst.msk [vmem:[%s6 + $0x20] sm:$0xff] %vm1184, %v1156
  %1190 = vst.msk [vmem:[%s6 + $0x28] sm:$0xff] %vm1184, %v1157
  %1191 = vst.msk [vmem:[%s6 + $0x30] sm:$0xff] %vm1184, %v1158
  %1192 = vst.msk [vmem:[%s6 + $0x38] sm:$0xff] %vm1184, %v1159
  %1193 = vst.msk [vmem:[%s6 + $0x40] sm:$0xff] %vm1184, %v1160
  %1194 = vst.msk [vmem:[%s6 + $0x48] sm:$0xff] %vm1184, %v1161
  %1195 = vst.msk [vmem:[%s6 + $0x50] sm:$0xff] %vm1184, %v1162
  %1196 = vst.msk [vmem:[%s6 + $0x58] sm:$0xff] %vm1184, %v1163
  %1197 = vst.msk [vmem:[%s6 + $0x60] sm:$0xff] %vm1184, %v1164
  %1198 = vst.msk [vmem:[%s6 + $0x68] sm:$0xff] %vm1184, %v1165
  %1199 = vst.msk [vmem:[%s6 + $0x70] sm:$0xff] %vm1184, %v1166
  %1200 = vst.msk [vmem:[%s6 + $0x78] sm:$0xff] %vm1184, %v1167
  %1201 = vst.msk [vmem:[%s6 + $0x80] sm:$0xff] %vm1184, %v1168
  %1202 = vst.msk [vmem:[%s6 + $0x88] sm:$0xff] %vm1184, %v1169
  %1203 = vst.msk [vmem:[%s6 + $0x90] sm:$0xff] %vm1184, %v1170
  %1204 = vst.msk [vmem:[%s6 + $0x98] sm:$0xff] %vm1184, %v1171
  %1205 = vst.msk [vmem:[%s6 + $0xa0] sm:$0xff] %vm1184, %v1172
  %1206 = vst.msk [vmem:[%s6 + $0xa8] sm:$0xff] %vm1184, %v1173
  %1207 = vst.msk [vmem:[%s6 + $0xb0] sm:$0xff] %vm1184, %v1174
  %1208 = vst.msk [vmem:[%s6 + $0xb8] sm:$0xff] %vm1184, %v1175
  %1209 = vst.msk [vmem:[%s6 + $0xc0] sm:$0xff] %vm1184, %v1176
  %1210 = vst.msk [vmem:[%s6 + $0xc8] sm:$0xff] %vm1184, %v1177
  %1211 = vst.msk [vmem:[%s6 + $0xd0] sm:$0xff] %vm1184, %v1178
  %1212 = vst.msk [vmem:[%s6 + $0xd8] sm:$0xff] %vm1184, %v1179
  %1213 = vst.msk [vmem:[%s6 + $0xe0] sm:$0xff] %vm1184, %v1180
  %1214 = vst.msk [vmem:[%s6 + $0xe8] sm:$0xff] %vm1184, %v1181
  %1215 = vst.msk [vmem:[%s6 + $0xf0] sm:$0xff] %vm1184, %v1182
  %1216 = vst.msk [vmem:[%s6 + $0xf8] sm:$0xff] %vm1184, %v1183
  // Predicated region
  $region26: #{tpu_custom_call.1} parent=0 // pred_check
    _
  $region27: #{tpu_custom_call.1} parent=0 // pred_check_branch
    %1218 = sbr.rel (0) target = $region29
  $region28: #{tpu_custom_call.1} parent=0 // pred_region
    _
  $region29: #{tpu_custom_call.1} parent=0 // pred_fallthru
    _
  // Predicated region
  $region30: #{tpu_custom_call.1} parent=0 // pred_check
    _
  $region31: #{tpu_custom_call.1} parent=0 // pred_check_branch
    %1220 = sbr.rel (0) target = $region33
  $region32: #{tpu_custom_call.1} parent=0 // pred_region
    _
  $region33: #{tpu_custom_call.1} parent=0 // pred_fallthru
    _

// kernel: tpu_custom_call.1
$region0: #{tpu_custom_call.1}
  #allocation0 [shape = 'u32[]', space=smem, size = 0x4, offset = 0x4, fixed_abs, tag = 'smem constant byte address 0x4 - core index']
  #allocation1 [shape = 'u32[72,128]{1,0:T(1,128)}', space=vmem, size = 0x9000, scoped, tag = 'internal scratch']
  %s0 = inlined_call_operand.vmem [shape: f32[256,16], index: 0, kind: input, shape index: {}]
  %s1 = inlined_call_operand.vmem [shape: bf16[16,128], index: 1, kind: input, shape index: {}]
  %s2 = inlined_call_operand.vmem [shape: bf16[2,128,128], index: 2, kind: input, shape index: {}]
  %s3 = inlined_call_operand.vmem [shape: f32[3,128], index: 3, kind: input, shape index: {}]
  %s4 = inlined_call_operand.vmem [shape: bf16[128,8], index: 4, kind: input, shape index: {}]
  %s5 = inlined_call_operand.vmem [shape: f32[1,8], index: 5, kind: input, shape index: {}]
  %s6 = inlined_call_operand.vmem [shape: f32[256,8], index: 6, kind: output, shape index: {}]
  %s7 = sld [smem:[#allocation0]]
  $region34: #{tpu_custom_call.1} parent=0
    _
  %s9 = ssub.s32 1, %s7
  %s10 = scalar_select 0, %s9, %s7
  // Predicated region
  $region2: #{tpu_custom_call.1} parent=0 // pred_check
    _
  $region3: #{tpu_custom_call.1} parent=0 // pred_check_branch
    %12 = sbr.rel (0) target = $region5
  $region4: #{tpu_custom_call.1} parent=0 // pred_region
    _
  $region5: #{tpu_custom_call.1} parent=0 // pred_fallthru
    _
  // Predicated region
  $region6: #{tpu_custom_call.1} parent=0 // pred_check
    _
  $region7: #{tpu_custom_call.1} parent=0 // pred_check_branch
    %14 = sbr.rel (0) target = $region9
  $region8: #{tpu_custom_call.1} parent=0 // pred_region
    _
  $region9: #{tpu_custom_call.1} parent=0 // pred_fallthru
    _
  // Predicated region
  $region10: #{tpu_custom_call.1} parent=0 // pred_check
    _
  $region11: #{tpu_custom_call.1} parent=0 // pred_check_branch
    %16 = sbr.rel (0) target = $region13
  $region12: #{tpu_custom_call.1} parent=0 // pred_region
    _
  $region13: #{tpu_custom_call.1} parent=0 // pred_fallthru
    _
  // Predicated region
  $region14: #{tpu_custom_call.1} parent=0 // pred_check
    _
  $region15: #{tpu_custom_call.1} parent=0 // pred_check_branch
    %18 = sbr.rel (0) target = $region17
  $region16: #{tpu_custom_call.1} parent=0 // pred_region
    _
  $region17: #{tpu_custom_call.1} parent=0 // pred_fallthru
    _
  // Predicated region
  $region18: #{tpu_custom_call.1} parent=0 // pred_check
    _
  $region19: #{tpu_custom_call.1} parent=0 // pred_check_branch
    %20 = sbr.rel (0) target = $region21
  $region20: #{tpu_custom_call.1} parent=0 // pred_region
    _
  $region21: #{tpu_custom_call.1} parent=0 // pred_fallthru
    _
  // Predicated region
  $region22: #{tpu_custom_call.1} parent=0 // pred_check
    _
  $region23: #{tpu_custom_call.1} parent=0 // pred_check_branch
    %22 = sbr.rel (0) target = $region25
  $region24: #{tpu_custom_call.1} parent=0 // pred_region
    _
  $region25: #{tpu_custom_call.1} parent=0 // pred_fallthru
    _
  %v24 = vld [vmem:[%s0] sm:$0xff]
  %v25 = vld [vmem:[%s0 + $0x8] sm:$0xff]
  %v26 = vld [vmem:[%s0 + $0x10] sm:$0xff]
  %v27 = vld [vmem:[%s0 + $0x18] sm:$0xff]
  %v28 = vld [vmem:[%s0 + $0x20] sm:$0xff]
  %v29 = vld [vmem:[%s0 + $0x28] sm:$0xff]
  %v30 = vld [vmem:[%s0 + $0x30] sm:$0xff]
  %v31 = vld [vmem:[%s0 + $0x38] sm:$0xff]
  %v32 = vld [vmem:[%s0 + $0x40] sm:$0xff]
  %v33 = vld [vmem:[%s0 + $0x48] sm:$0xff]
  %v34 = vld [vmem:[%s0 + $0x50] sm:$0xff]
  %v35 = vld [vmem:[%s0 + $0x58] sm:$0xff]
  %v36 = vld [vmem:[%s0 + $0x60] sm:$0xff]
  %v37 = vld [vmem:[%s0 + $0x68] sm:$0xff]
  %v38 = vld [vmem:[%s0 + $0x70] sm:$0xff]
  %v39 = vld [vmem:[%s0 + $0x78] sm:$0xff]
  %v40 = vld [vmem:[%s0 + $0x80] sm:$0xff]
  %v41 = vld [vmem:[%s0 + $0x88] sm:$0xff]
  %v42 = vld [vmem:[%s0 + $0x90] sm:$0xff]
  %v43 = vld [vmem:[%s0 + $0x98] sm:$0xff]
  %v44 = vld [vmem:[%s0 + $0xa0] sm:$0xff]
  %v45 = vld [vmem:[%s0 + $0xa8] sm:$0xff]
  %v46 = vld [vmem:[%s0 + $0xb0] sm:$0xff]
  %v47 = vld [vmem:[%s0 + $0xb8] sm:$0xff]
  %v48 = vld [vmem:[%s0 + $0xc0] sm:$0xff]
  %v49 = vld [vmem:[%s0 + $0xc8] sm:$0xff]
  %v50 = vld [vmem:[%s0 + $0xd0] sm:$0xff]
  %v51 = vld [vmem:[%s0 + $0xd8] sm:$0xff]
  %v52 = vld [vmem:[%s0 + $0xe0] sm:$0xff]
  %v53 = vld [vmem:[%s0 + $0xe8] sm:$0xff]
  %v54 = vld [vmem:[%s0 + $0xf0] sm:$0xff]
  %v55 = vld [vmem:[%s0 + $0xf8] sm:$0xff]
  %v56 = vpack.c.bf16 %v25, %v24
  %v57 = vpack.c.bf16 %v27, %v26
  %v58 = vpack.c.bf16 %v29, %v28
  %v59 = vpack.c.bf16 %v31, %v30
  %v60 = vpack.c.bf16 %v33, %v32
  %v61 = vpack.c.bf16 %v35, %v34
  %v62 = vpack.c.bf16 %v37, %v36
  %v63 = vpack.c.bf16 %v39, %v38
  %v64 = vpack.c.bf16 %v41, %v40
  %v65 = vpack.c.bf16 %v43, %v42
  %v66 = vpack.c.bf16 %v45, %v44
  %v67 = vpack.c.bf16 %v47, %v46
  %v68 = vpack.c.bf16 %v49, %v48
  %v69 = vpack.c.bf16 %v51, %v50
  %v70 = vpack.c.bf16 %v53, %v52
  %v71 = vpack.c.bf16 %v55, %v54
  %v72 = vld [vmem:[%s1] sm:$0xf]
  %v73 = vld [vmem:[%s1 + $0x4] sm:$0xf]
  %v74 = vld [vmem:[%s3] sm:$0x1]
  %v75 = vperm.slane %v74, 0
  %v78 = vunpack.c.l.b16 %v72
  %v79 = vunpack.c.l.b16 %v73
  %v80 = vpack.c.b16 %v79, %v78
  %vm82 = vcmask 130048
  %v84 = vsel %vm82, %v56, 0
  %v87 = vsel %vm82, %v57, 0
  %v90 = vsel %vm82, %v58, 0
  %v93 = vsel %vm82, %v59, 0
  %v96 = vsel %vm82, %v60, 0
  %v99 = vsel %vm82, %v61, 0
  %v102 = vsel %vm82, %v62, 0
  %v105 = vsel %vm82, %v63, 0
  %v108 = vsel %vm82, %v64, 0
  %v111 = vsel %vm82, %v65, 0
  %v114 = vsel %vm82, %v66, 0
  %v117 = vsel %vm82, %v67, 0
  %v120 = vsel %vm82, %v68, 0
  %v123 = vsel %vm82, %v69, 0
  %v126 = vsel %vm82, %v70, 0
  %v129 = vsel %vm82, %v71, 0
  %131 = vmatpush.bf16.msra.mxu0 0
  %132 = vmatpush.bf16.msra.mxu0 0
  %133 = vmatpush.bf16.msra.mxu0 0
  %134 = vmatpush.bf16.msra.mxu0 0
  %135 = vmatpush.bf16.msra.mxu0 0
  %136 = vmatpush.bf16.msra.mxu0 0
  %137 = vmatpush.bf16.msra.mxu0 0
  %138 = vmatpush.bf16.msra.mxu0 %v80
  %139 = vmatmul.bf16.gmra.mxu0 %v84
  %v140 = vpop.f32.mrf.mxu0
  %v141 = vadd.f32 %v75, %v140
  %v142 = vpop.f32.mrf.mxu0
  %v143 = vadd.f32 %v75, %v142
  %144 = vmatmul.bf16.gmra.mxu0 %v87
  %v145 = vpop.f32.mrf.mxu0
  %v146 = vadd.f32 %v75, %v145
  %v147 = vpop.f32.mrf.mxu0
  %v148 = vadd.f32 %v75, %v147
  %149 = vmatmul.bf16.gmra.mxu0 %v90
  %v150 = vpop.f32.mrf.mxu0
  %v151 = vadd.f32 %v75, %v150
  %v152 = vpop.f32.mrf.mxu0
  %v153 = vadd.f32 %v75, %v152
  %154 = vmatmul.bf16.gmra.mxu0 %v93
  %v155 = vpop.f32.mrf.mxu0
  %v156 = vadd.f32 %v75, %v155
  %v157 = vpop.f32.mrf.mxu0
  %v158 = vadd.f32 %v75, %v157
  %159 = vmatmul.bf16.gmra.mxu0 %v96
  %v160 = vpop.f32.mrf.mxu0
  %v161 = vadd.f32 %v75, %v160
  %v162 = vpop.f32.mrf.mxu0
  %v163 = vadd.f32 %v75, %v162
  %164 = vmatmul.bf16.gmra.mxu0 %v99
  %v165 = vpop.f32.mrf.mxu0
  %v166 = vadd.f32 %v75, %v165
  %v167 = vpop.f32.mrf.mxu0
  %v168 = vadd.f32 %v75, %v167
  %169 = vmatmul.bf16.gmra.mxu0 %v102
  %v170 = vpop.f32.mrf.mxu0
  %v171 = vadd.f32 %v75, %v170
  %v172 = vpop.f32.mrf.mxu0
  %v173 = vadd.f32 %v75, %v172
  %174 = vmatmul.bf16.gmra.mxu0 %v105
  %v175 = vpop.f32.mrf.mxu0
  %v176 = vadd.f32 %v75, %v175
  %v177 = vpop.f32.mrf.mxu0
  %v178 = vadd.f32 %v75, %v177
  %179 = vmatmul.bf16.gmra.mxu0 %v108
  %v180 = vpop.f32.mrf.mxu0
  %v181 = vadd.f32 %v75, %v180
  %v182 = vpop.f32.mrf.mxu0
  %v183 = vadd.f32 %v75, %v182
  %184 = vmatmul.bf16.gmra.mxu0 %v111
  %v185 = vpop.f32.mrf.mxu0
  %v186 = vadd.f32 %v75, %v185
  %v187 = vpop.f32.mrf.mxu0
  %v188 = vadd.f32 %v75, %v187
  %189 = vmatmul.bf16.gmra.mxu0 %v114
  %v190 = vpop.f32.mrf.mxu0
  %v191 = vadd.f32 %v75, %v190
  %v192 = vpop.f32.mrf.mxu0
  %v193 = vadd.f32 %v75, %v192
  %194 = vmatmul.bf16.gmra.mxu0 %v117
  %v195 = vpop.f32.mrf.mxu0
  %v196 = vadd.f32 %v75, %v195
  %v197 = vpop.f32.mrf.mxu0
  %v198 = vadd.f32 %v75, %v197
  %199 = vmatmul.bf16.gmra.mxu0 %v120
  %v200 = vpop.f32.mrf.mxu0
  %v201 = vadd.f32 %v75, %v200
  %v202 = vpop.f32.mrf.mxu0
  %v203 = vadd.f32 %v75, %v202
  %204 = vmatmul.bf16.gmra.mxu0 %v123
  %v205 = vpop.f32.mrf.mxu0
  %v206 = vadd.f32 %v75, %v205
  %v207 = vpop.f32.mrf.mxu0
  %v208 = vadd.f32 %v75, %v207
  %209 = vmatmul.bf16.gmra.mxu0 %v126
  %v210 = vpop.f32.mrf.mxu0
  %v211 = vadd.f32 %v75, %v210
  %v212 = vpop.f32.mrf.mxu0
  %v213 = vadd.f32 %v75, %v212
  %214 = vmatmul.bf16.gmra.mxu0 %v129
  %v215 = vpop.f32.mrf.mxu0
  %v216 = vadd.f32 %v75, %v215
  %v217 = vpop.f32.mrf.mxu0
  %v218 = vadd.f32 %v75, %v217
  %219 = vdwg.mxu0
  %vm220 = vcmp.gt.f32.partialorder %v141, 0.0
  %vm221 = vcmp.gt.f32.partialorder %v143, 0.0
  %vm222 = vcmp.gt.f32.partialorder %v146, 0.0
  %vm223 = vcmp.gt.f32.partialorder %v148, 0.0
  %vm224 = vcmp.gt.f32.partialorder %v151, 0.0
  %vm225 = vcmp.gt.f32.partialorder %v153, 0.0
  %vm226 = vcmp.gt.f32.partialorder %v156, 0.0
  %vm227 = vcmp.gt.f32.partialorder %v158, 0.0
  %vm228 = vcmp.gt.f32.partialorder %v161, 0.0
  %vm229 = vcmp.gt.f32.partialorder %v163, 0.0
  %vm230 = vcmp.gt.f32.partialorder %v166, 0.0
  %vm231 = vcmp.gt.f32.partialorder %v168, 0.0
  %vm232 = vcmp.gt.f32.partialorder %v171, 0.0
  %vm233 = vcmp.gt.f32.partialorder %v173, 0.0
  %vm234 = vcmp.gt.f32.partialorder %v176, 0.0
  %vm235 = vcmp.gt.f32.partialorder %v178, 0.0
  %vm236 = vcmp.gt.f32.partialorder %v181, 0.0
  %vm237 = vcmp.gt.f32.partialorder %v183, 0.0
  %vm238 = vcmp.gt.f32.partialorder %v186, 0.0
  %vm239 = vcmp.gt.f32.partialorder %v188, 0.0
  %vm240 = vcmp.gt.f32.partialorder %v191, 0.0
  %vm241 = vcmp.gt.f32.partialorder %v193, 0.0
  %vm242 = vcmp.gt.f32.partialorder %v196, 0.0
  %vm243 = vcmp.gt.f32.partialorder %v198, 0.0
  %vm244 = vcmp.gt.f32.partialorder %v201, 0.0
  %vm245 = vcmp.gt.f32.partialorder %v203, 0.0
  %vm246 = vcmp.gt.f32.partialorder %v206, 0.0
  %vm247 = vcmp.gt.f32.partialorder %v208, 0.0
  %vm248 = vcmp.gt.f32.partialorder %v211, 0.0
  %vm249 = vcmp.gt.f32.partialorder %v213, 0.0
  %vm250 = vcmp.gt.f32.partialorder %v216, 0.0
  %vm251 = vcmp.gt.f32.partialorder %v218, 0.0
  %v252 = vmul.f32 %v141, 0.01
  %v253 = vmul.f32 %v143, 0.01
  %v254 = vmul.f32 %v146, 0.01
  %v255 = vmul.f32 %v148, 0.01
  %v256 = vmul.f32 %v151, 0.01
  %v257 = vmul.f32 %v153, 0.01
  %v258 = vmul.f32 %v156, 0.01
  %v259 = vmul.f32 %v158, 0.01
  %v260 = vmul.f32 %v161, 0.01
  %v261 = vmul.f32 %v163, 0.01
  %v262 = vmul.f32 %v166, 0.01
  %v263 = vmul.f32 %v168, 0.01
  %v264 = vmul.f32 %v171, 0.01
  %v265 = vmul.f32 %v173, 0.01
  %v266 = vmul.f32 %v176, 0.01
  %v267 = vmul.f32 %v178, 0.01
  %v268 = vmul.f32 %v181, 0.01
  %v269 = vmul.f32 %v183, 0.01
  %v270 = vmul.f32 %v186, 0.01
  %v271 = vmul.f32 %v188, 0.01
  %v272 = vmul.f32 %v191, 0.01
  %v273 = vmul.f32 %v193, 0.01
  %v274 = vmul.f32 %v196, 0.01
  %v275 = vmul.f32 %v198, 0.01
  %v276 = vmul.f32 %v201, 0.01
  %v277 = vmul.f32 %v203, 0.01
  %v278 = vmul.f32 %v206, 0.01
  %v279 = vmul.f32 %v208, 0.01
  %v280 = vmul.f32 %v211, 0.01
  %v281 = vmul.f32 %v213, 0.01
  %v282 = vmul.f32 %v216, 0.01
  %v283 = vmul.f32 %v218, 0.01
  %v284 = vsel %vm220, %v141, %v252
  %v285 = vsel %vm221, %v143, %v253
  %v286 = vsel %vm222, %v146, %v254
  %v287 = vsel %vm223, %v148, %v255
  %v288 = vsel %vm224, %v151, %v256
  %v289 = vsel %vm225, %v153, %v257
  %v290 = vsel %vm226, %v156, %v258
  %v291 = vsel %vm227, %v158, %v259
  %v292 = vsel %vm228, %v161, %v260
  %v293 = vsel %vm229, %v163, %v261
  %v294 = vsel %vm230, %v166, %v262
  %v295 = vsel %vm231, %v168, %v263
  %v296 = vsel %vm232, %v171, %v264
  %v297 = vsel %vm233, %v173, %v265
  %v298 = vsel %vm234, %v176, %v266
  %v299 = vsel %vm235, %v178, %v267
  %v300 = vsel %vm236, %v181, %v268
  %v301 = vsel %vm237, %v183, %v269
  %v302 = vsel %vm238, %v186, %v270
  %v303 = vsel %vm239, %v188, %v271
  %v304 = vsel %vm240, %v191, %v272
  %v305 = vsel %vm241, %v193, %v273
  %v306 = vsel %vm242, %v196, %v274
  %v307 = vsel %vm243, %v198, %v275
  %v308 = vsel %vm244, %v201, %v276
  %v309 = vsel %vm245, %v203, %v277
  %v310 = vsel %vm246, %v206, %v278
  %v311 = vsel %vm247, %v208, %v279
  %v312 = vsel %vm248, %v211, %v280
  %v313 = vsel %vm249, %v213, %v281
  %v314 = vsel %vm250, %v216, %v282
  %v315 = vsel %vm251, %v218, %v283
  %v316 = vpack.c.bf16 %v285, %v284
  %v317 = vpack.c.bf16 %v287, %v286
  %v318 = vpack.c.bf16 %v289, %v288
  %v319 = vpack.c.bf16 %v291, %v290
  %v320 = vpack.c.bf16 %v293, %v292
  %v321 = vpack.c.bf16 %v295, %v294
  %v322 = vpack.c.bf16 %v297, %v296
  %v323 = vpack.c.bf16 %v299, %v298
  %v324 = vpack.c.bf16 %v301, %v300
  %v325 = vpack.c.bf16 %v303, %v302
  %v326 = vpack.c.bf16 %v305, %v304
  %v327 = vpack.c.bf16 %v307, %v306
  %v328 = vpack.c.bf16 %v309, %v308
  %v329 = vpack.c.bf16 %v311, %v310
  %v330 = vpack.c.bf16 %v313, %v312
  %v331 = vpack.c.bf16 %v315, %v314
  %v332 = vld [vmem:[%s2] sm:$0xf]
  %v333 = vld [vmem:[%s2 + $0x4] sm:$0xf]
  %v334 = vld [vmem:[%s2 + $0x8] sm:$0xf]
  %v335 = vld [vmem:[%s2 + $0xc] sm:$0xf]
  %v336 = vld [vmem:[%s2 + $0x10] sm:$0xf]
  %v337 = vld [vmem:[%s2 + $0x14] sm:$0xf]
  %v338 = vld [vmem:[%s2 + $0x18] sm:$0xf]
  %v339 = vld [vmem:[%s2 + $0x1c] sm:$0xf]
  %v340 = vld [vmem:[%s2 + $0x20] sm:$0xf]
  %v341 = vld [vmem:[%s2 + $0x24] sm:$0xf]
  %v342 = vld [vmem:[%s2 + $0x28] sm:$0xf]
  %v343 = vld [vmem:[%s2 + $0x2c] sm:$0xf]
  %v344 = vld [vmem:[%s2 + $0x30] sm:$0xf]
  %v345 = vld [vmem:[%s2 + $0x34] sm:$0xf]
  %v346 = vld [vmem:[%s2 + $0x38] sm:$0xf]
  %v347 = vld [vmem:[%s2 + $0x3c] sm:$0xf]
  %v348 = vld [vmem:[%s3 + $0x1] sm:$0x1]
  %v349 = vperm.slane %v348, 0
  %v366 = vunpack.c.l.b16 %v332
  %v367 = vunpack.c.l.b16 %v333
  %v368 = vunpack.c.l.b16 %v334
  %v369 = vunpack.c.l.b16 %v335
  %v370 = vunpack.c.l.b16 %v336
  %v371 = vunpack.c.l.b16 %v337
  %v372 = vunpack.c.l.b16 %v338
  %v373 = vunpack.c.l.b16 %v339
  %v374 = vunpack.c.l.b16 %v340
  %v375 = vunpack.c.l.b16 %v341
  %v376 = vunpack.c.l.b16 %v342
  %v377 = vunpack.c.l.b16 %v343
  %v378 = vunpack.c.l.b16 %v344
  %v379 = vunpack.c.l.b16 %v345
  %v380 = vunpack.c.l.b16 %v346
  %v381 = vunpack.c.l.b16 %v347
  %v382 = vpack.c.b16 %v367, %v366
  %v383 = vpack.c.b16 %v369, %v368
  %v384 = vpack.c.b16 %v371, %v370
  %v385 = vpack.c.b16 %v373, %v372
  %v386 = vpack.c.b16 %v375, %v374
  %v387 = vpack.c.b16 %v377, %v376
  %v388 = vpack.c.b16 %v379, %v378
  %v389 = vpack.c.b16 %v381, %v380
  %398 = vmatpush.bf16.msra.mxu0 %v389
  %399 = vmatpush.bf16.msra.mxu0 %v388
  %400 = vmatpush.bf16.msra.mxu0 %v387
  %401 = vmatpush.bf16.msra.mxu0 %v386
  %402 = vmatpush.bf16.msra.mxu0 %v385
  %403 = vmatpush.bf16.msra.mxu0 %v384
  %404 = vmatpush.bf16.msra.mxu0 %v383
  %405 = vmatpush.bf16.msra.mxu0 %v382
  %406 = vmatmul.bf16.gmra.mxu0 %v316
  %v407 = vpop.f32.mrf.mxu0
  %v408 = vadd.f32 %v349, %v407
  %v409 = vpop.f32.mrf.mxu0
  %v410 = vadd.f32 %v349, %v409
  %411 = vmatmul.bf16.gmra.mxu0 %v317
  %v412 = vpop.f32.mrf.mxu0
  %v413 = vadd.f32 %v349, %v412
  %v414 = vpop.f32.mrf.mxu0
  %v415 = vadd.f32 %v349, %v414
  %416 = vmatmul.bf16.gmra.mxu0 %v318
  %v417 = vpop.f32.mrf.mxu0
  %v418 = vadd.f32 %v349, %v417
  %v419 = vpop.f32.mrf.mxu0
  %v420 = vadd.f32 %v349, %v419
  %421 = vmatmul.bf16.gmra.mxu0 %v319
  %v422 = vpop.f32.mrf.mxu0
  %v423 = vadd.f32 %v349, %v422
  %v424 = vpop.f32.mrf.mxu0
  %v425 = vadd.f32 %v349, %v424
  %426 = vmatmul.bf16.gmra.mxu0 %v320
  %v427 = vpop.f32.mrf.mxu0
  %v428 = vadd.f32 %v349, %v427
  %v429 = vpop.f32.mrf.mxu0
  %v430 = vadd.f32 %v349, %v429
  %431 = vmatmul.bf16.gmra.mxu0 %v321
  %v432 = vpop.f32.mrf.mxu0
  %v433 = vadd.f32 %v349, %v432
  %v434 = vpop.f32.mrf.mxu0
  %v435 = vadd.f32 %v349, %v434
  %436 = vmatmul.bf16.gmra.mxu0 %v322
  %v437 = vpop.f32.mrf.mxu0
  %v438 = vadd.f32 %v349, %v437
  %v439 = vpop.f32.mrf.mxu0
  %v440 = vadd.f32 %v349, %v439
  %441 = vmatmul.bf16.gmra.mxu0 %v323
  %v442 = vpop.f32.mrf.mxu0
  %v443 = vadd.f32 %v349, %v442
  %v444 = vpop.f32.mrf.mxu0
  %v445 = vadd.f32 %v349, %v444
  %446 = vmatmul.bf16.gmra.mxu0 %v324
  %v447 = vpop.f32.mrf.mxu0
  %v448 = vadd.f32 %v349, %v447
  %v449 = vpop.f32.mrf.mxu0
  %v450 = vadd.f32 %v349, %v449
  %451 = vmatmul.bf16.gmra.mxu0 %v325
  %v452 = vpop.f32.mrf.mxu0
  %v453 = vadd.f32 %v349, %v452
  %v454 = vpop.f32.mrf.mxu0
  %v455 = vadd.f32 %v349, %v454
  %456 = vmatmul.bf16.gmra.mxu0 %v326
  %v457 = vpop.f32.mrf.mxu0
  %v458 = vadd.f32 %v349, %v457
  %v459 = vpop.f32.mrf.mxu0
  %v460 = vadd.f32 %v349, %v459
  %461 = vmatmul.bf16.gmra.mxu0 %v327
  %v462 = vpop.f32.mrf.mxu0
  %v463 = vadd.f32 %v349, %v462
  %v464 = vpop.f32.mrf.mxu0
  %v465 = vadd.f32 %v349, %v464
  %466 = vmatmul.bf16.gmra.mxu0 %v328
  %v467 = vpop.f32.mrf.mxu0
  %v468 = vadd.f32 %v349, %v467
  %v469 = vpop.f32.mrf.mxu0
  %v470 = vadd.f32 %v349, %v469
  %471 = vmatmul.bf16.gmra.mxu0 %v329
  %v472 = vpop.f32.mrf.mxu0
  %v473 = vadd.f32 %v349, %v472
  %v474 = vpop.f32.mrf.mxu0
  %v475 = vadd.f32 %v349, %v474
  %476 = vmatmul.bf16.gmra.mxu0 %v330
  %v477 = vpop.f32.mrf.mxu0
  %v478 = vadd.f32 %v349, %v477
  %v479 = vpop.f32.mrf.mxu0
  %v480 = vadd.f32 %v349, %v479
  %481 = vmatmul.bf16.gmra.mxu0 %v331
  %v482 = vpop.f32.mrf.mxu0
  %v483 = vadd.f32 %v349, %v482
  %v484 = vpop.f32.mrf.mxu0
  %v485 = vadd.f32 %v349, %v484
  %486 = vdwg.mxu0
  %vm487 = vcmp.gt.f32.partialorder %v408, 0.0
  %vm488 = vcmp.gt.f32.partialorder %v410, 0.0
  %vm489 = vcmp.gt.f32.partialorder %v413, 0.0
  %vm490 = vcmp.gt.f32.partialorder %v415, 0.0
  %vm491 = vcmp.gt.f32.partialorder %v418, 0.0
  %vm492 = vcmp.gt.f32.partialorder %v420, 0.0
  %vm493 = vcmp.gt.f32.partialorder %v423, 0.0
  %vm494 = vcmp.gt.f32.partialorder %v425, 0.0
  %vm495 = vcmp.gt.f32.partialorder %v428, 0.0
  %vm496 = vcmp.gt.f32.partialorder %v430, 0.0
  %vm497 = vcmp.gt.f32.partialorder %v433, 0.0
  %vm498 = vcmp.gt.f32.partialorder %v435, 0.0
  %vm499 = vcmp.gt.f32.partialorder %v438, 0.0
  %vm500 = vcmp.gt.f32.partialorder %v440, 0.0
  %vm501 = vcmp.gt.f32.partialorder %v443, 0.0
  %vm502 = vcmp.gt.f32.partialorder %v445, 0.0
  %vm503 = vcmp.gt.f32.partialorder %v448, 0.0
  %vm504 = vcmp.gt.f32.partialorder %v450, 0.0
  %vm505 = vcmp.gt.f32.partialorder %v453, 0.0
  %vm506 = vcmp.gt.f32.partialorder %v455, 0.0
  %vm507 = vcmp.gt.f32.partialorder %v458, 0.0
  %vm508 = vcmp.gt.f32.partialorder %v460, 0.0
  %vm509 = vcmp.gt.f32.partialorder %v463, 0.0
  %vm510 = vcmp.gt.f32.partialorder %v465, 0.0
  %vm511 = vcmp.gt.f32.partialorder %v468, 0.0
  %vm512 = vcmp.gt.f32.partialorder %v470, 0.0
  %vm513 = vcmp.gt.f32.partialorder %v473, 0.0
  %vm514 = vcmp.gt.f32.partialorder %v475, 0.0
  %vm515 = vcmp.gt.f32.partialorder %v478, 0.0
  %vm516 = vcmp.gt.f32.partialorder %v480, 0.0
  %vm517 = vcmp.gt.f32.partialorder %v483, 0.0
  %vm518 = vcmp.gt.f32.partialorder %v485, 0.0
  %v519 = vmul.f32 %v408, 0.01
  %v520 = vmul.f32 %v410, 0.01
  %v521 = vmul.f32 %v413, 0.01
  %v522 = vmul.f32 %v415, 0.01
  %v523 = vmul.f32 %v418, 0.01
  %v524 = vmul.f32 %v420, 0.01
  %v525 = vmul.f32 %v423, 0.01
  %v526 = vmul.f32 %v425, 0.01
  %v527 = vmul.f32 %v428, 0.01
  %v528 = vmul.f32 %v430, 0.01
  %v529 = vmul.f32 %v433, 0.01
  %v530 = vmul.f32 %v435, 0.01
  %v531 = vmul.f32 %v438, 0.01
  %v532 = vmul.f32 %v440, 0.01
  %v533 = vmul.f32 %v443, 0.01
  %v534 = vmul.f32 %v445, 0.01
  %v535 = vmul.f32 %v448, 0.01
  %v536 = vmul.f32 %v450, 0.01
  %v537 = vmul.f32 %v453, 0.01
  %v538 = vmul.f32 %v455, 0.01
  %v539 = vmul.f32 %v458, 0.01
  %v540 = vmul.f32 %v460, 0.01
  %v541 = vmul.f32 %v463, 0.01
  %v542 = vmul.f32 %v465, 0.01
  %v543 = vmul.f32 %v468, 0.01
  %v544 = vmul.f32 %v470, 0.01
  %v545 = vmul.f32 %v473, 0.01
  %v546 = vmul.f32 %v475, 0.01
  %v547 = vmul.f32 %v478, 0.01
  %v548 = vmul.f32 %v480, 0.01
  %v549 = vmul.f32 %v483, 0.01
  %v550 = vmul.f32 %v485, 0.01
  %v551 = vsel %vm487, %v408, %v519
  %v552 = vsel %vm488, %v410, %v520
  %v553 = vsel %vm489, %v413, %v521
  %v554 = vsel %vm490, %v415, %v522
  %v555 = vsel %vm491, %v418, %v523
  %v556 = vsel %vm492, %v420, %v524
  %v557 = vsel %vm493, %v423, %v525
  %v558 = vsel %vm494, %v425, %v526
  %v559 = vsel %vm495, %v428, %v527
  %v560 = vsel %vm496, %v430, %v528
  %v561 = vsel %vm497, %v433, %v529
  %v562 = vsel %vm498, %v435, %v530
  %v563 = vsel %vm499, %v438, %v531
  %v564 = vsel %vm500, %v440, %v532
  %v565 = vsel %vm501, %v443, %v533
  %v566 = vsel %vm502, %v445, %v534
  %v567 = vsel %vm503, %v448, %v535
  %v568 = vsel %vm504, %v450, %v536
  %v569 = vsel %vm505, %v453, %v537
  %v570 = vsel %vm506, %v455, %v538
  %v571 = vsel %vm507, %v458, %v539
  %v572 = vsel %vm508, %v460, %v540
  %v573 = vsel %vm509, %v463, %v541
  %v574 = vsel %vm510, %v465, %v542
  %v575 = vsel %vm511, %v468, %v543
  %v576 = vsel %vm512, %v470, %v544
  %v577 = vsel %vm513, %v473, %v545
  %v578 = vsel %vm514, %v475, %v546
  %v579 = vsel %vm515, %v478, %v547
  %v580 = vsel %vm516, %v480, %v548
  %v581 = vsel %vm517, %v483, %v549
  %v582 = vsel %vm518, %v485, %v550
  %v583 = vpack.c.bf16 %v552, %v551
  %v584 = vpack.c.bf16 %v554, %v553
  %v585 = vpack.c.bf16 %v556, %v555
  %v586 = vpack.c.bf16 %v558, %v557
  %v587 = vpack.c.bf16 %v560, %v559
  %v588 = vpack.c.bf16 %v562, %v561
  %v589 = vpack.c.bf16 %v564, %v563
  %v590 = vpack.c.bf16 %v566, %v565
  %v591 = vpack.c.bf16 %v568, %v567
  %v592 = vpack.c.bf16 %v570, %v569
  %v593 = vpack.c.bf16 %v572, %v571
  %v594 = vpack.c.bf16 %v574, %v573
  %v595 = vpack.c.bf16 %v576, %v575
  %v596 = vpack.c.bf16 %v578, %v577
  %v597 = vpack.c.bf16 %v580, %v579
  %v598 = vpack.c.bf16 %v582, %v581
  %s599 = scalar_lea.vmem %s2, 64
  %v600 = vld [vmem:[%s599] sm:$0xf]
  %v601 = vld [vmem:[%s599 + $0x4] sm:$0xf]
  %v602 = vld [vmem:[%s599 + $0x8] sm:$0xf]
  %v603 = vld [vmem:[%s599 + $0xc] sm:$0xf]
  %v604 = vld [vmem:[%s599 + $0x10] sm:$0xf]
  %v605 = vld [vmem:[%s599 + $0x14] sm:$0xf]
  %v606 = vld [vmem:[%s599 + $0x18] sm:$0xf]
  %v607 = vld [vmem:[%s599 + $0x1c] sm:$0xf]
  %v608 = vld [vmem:[%s599 + $0x20] sm:$0xf]
  %v609 = vld [vmem:[%s599 + $0x24] sm:$0xf]
  %v610 = vld [vmem:[%s599 + $0x28] sm:$0xf]
  %v611 = vld [vmem:[%s599 + $0x2c] sm:$0xf]
  %v612 = vld [vmem:[%s599 + $0x30] sm:$0xf]
  %v613 = vld [vmem:[%s599 + $0x34] sm:$0xf]
  %v614 = vld [vmem:[%s599 + $0x38] sm:$0xf]
  %v615 = vld [vmem:[%s599 + $0x3c] sm:$0xf]
  %v616 = vld [vmem:[%s3 + $0x2] sm:$0x1]
  %v617 = vperm.slane %v616, 0
  %v634 = vunpack.c.l.b16 %v600
  %v635 = vunpack.c.l.b16 %v601
  %v636 = vunpack.c.l.b16 %v602
  %v637 = vunpack.c.l.b16 %v603
  %v638 = vunpack.c.l.b16 %v604
  %v639 = vunpack.c.l.b16 %v605
  %v640 = vunpack.c.l.b16 %v606
  %v641 = vunpack.c.l.b16 %v607
  %v642 = vunpack.c.l.b16 %v608
  %v643 = vunpack.c.l.b16 %v609
  %v644 = vunpack.c.l.b16 %v610
  %v645 = vunpack.c.l.b16 %v611
  %v646 = vunpack.c.l.b16 %v612
  %v647 = vunpack.c.l.b16 %v613
  %v648 = vunpack.c.l.b16 %v614
  %v649 = vunpack.c.l.b16 %v615
  %v650 = vpack.c.b16 %v635, %v634
  %v651 = vpack.c.b16 %v637, %v636
  %v652 = vpack.c.b16 %v639, %v638
  %v653 = vpack.c.b16 %v641, %v640
  %v654 = vpack.c.b16 %v643, %v642
  %v655 = vpack.c.b16 %v645, %v644
  %v656 = vpack.c.b16 %v647, %v646
  %v657 = vpack.c.b16 %v649, %v648
  %666 = vmatpush.bf16.msra.mxu0 %v657
  %667 = vmatpush.bf16.msra.mxu0 %v656
  %668 = vmatpush.bf16.msra.mxu0 %v655
  %669 = vmatpush.bf16.msra.mxu0 %v654
  %670 = vmatpush.bf16.msra.mxu0 %v653
  %671 = vmatpush.bf16.msra.mxu0 %v652
  %672 = vmatpush.bf16.msra.mxu0 %v651
  %673 = vmatpush.bf16.msra.mxu0 %v650
  %674 = vmatmul.bf16.gmra.mxu0 %v583
  %v675 = vpop.f32.mrf.mxu0
  %v676 = vadd.f32 %v617, %v675
  %v677 = vpop.f32.mrf.mxu0
  %v678 = vadd.f32 %v617, %v677
  %679 = vmatmul.bf16.gmra.mxu0 %v584
  %v680 = vpop.f32.mrf.mxu0
  %v681 = vadd.f32 %v617, %v680
  %v682 = vpop.f32.mrf.mxu0
  %v683 = vadd.f32 %v617, %v682
  %684 = vmatmul.bf16.gmra.mxu0 %v585
  %v685 = vpop.f32.mrf.mxu0
  %v686 = vadd.f32 %v617, %v685
  %v687 = vpop.f32.mrf.mxu0
  %v688 = vadd.f32 %v617, %v687
  %689 = vmatmul.bf16.gmra.mxu0 %v586
  %v690 = vpop.f32.mrf.mxu0
  %v691 = vadd.f32 %v617, %v690
  %v692 = vpop.f32.mrf.mxu0
  %v693 = vadd.f32 %v617, %v692
  %694 = vmatmul.bf16.gmra.mxu0 %v587
  %v695 = vpop.f32.mrf.mxu0
  %v696 = vadd.f32 %v617, %v695
  %v697 = vpop.f32.mrf.mxu0
  %v698 = vadd.f32 %v617, %v697
  %699 = vmatmul.bf16.gmra.mxu0 %v588
  %v700 = vpop.f32.mrf.mxu0
  %v701 = vadd.f32 %v617, %v700
  %v702 = vpop.f32.mrf.mxu0
  %v703 = vadd.f32 %v617, %v702
  %704 = vmatmul.bf16.gmra.mxu0 %v589
  %v705 = vpop.f32.mrf.mxu0
  %v706 = vadd.f32 %v617, %v705
  %v707 = vpop.f32.mrf.mxu0
  %v708 = vadd.f32 %v617, %v707
  %709 = vmatmul.bf16.gmra.mxu0 %v590
  %v710 = vpop.f32.mrf.mxu0
  %v711 = vadd.f32 %v617, %v710
  %v712 = vpop.f32.mrf.mxu0
  %v713 = vadd.f32 %v617, %v712
  %714 = vmatmul.bf16.gmra.mxu0 %v591
  %v715 = vpop.f32.mrf.mxu0
  %v716 = vadd.f32 %v617, %v715
  %v717 = vpop.f32.mrf.mxu0
  %v718 = vadd.f32 %v617, %v717
  %719 = vmatmul.bf16.gmra.mxu0 %v592
  %v720 = vpop.f32.mrf.mxu0
  %v721 = vadd.f32 %v617, %v720
  %v722 = vpop.f32.mrf.mxu0
  %v723 = vadd.f32 %v617, %v722
  %724 = vmatmul.bf16.gmra.mxu0 %v593
  %v725 = vpop.f32.mrf.mxu0
  %v726 = vadd.f32 %v617, %v725
  %v727 = vpop.f32.mrf.mxu0
  %v728 = vadd.f32 %v617, %v727
  %729 = vmatmul.bf16.gmra.mxu0 %v594
  %v730 = vpop.f32.mrf.mxu0
  %v731 = vadd.f32 %v617, %v730
  %v732 = vpop.f32.mrf.mxu0
  %v733 = vadd.f32 %v617, %v732
  %734 = vmatmul.bf16.gmra.mxu0 %v595
  %v735 = vpop.f32.mrf.mxu0
  %v736 = vadd.f32 %v617, %v735
  %v737 = vpop.f32.mrf.mxu0
  %v738 = vadd.f32 %v617, %v737
  %739 = vmatmul.bf16.gmra.mxu0 %v596
  %v740 = vpop.f32.mrf.mxu0
  %v741 = vadd.f32 %v617, %v740
  %v742 = vpop.f32.mrf.mxu0
  %v743 = vadd.f32 %v617, %v742
  %744 = vmatmul.bf16.gmra.mxu0 %v597
  %v745 = vpop.f32.mrf.mxu0
  %v746 = vadd.f32 %v617, %v745
  %v747 = vpop.f32.mrf.mxu0
  %v748 = vadd.f32 %v617, %v747
  %749 = vmatmul.bf16.gmra.mxu0 %v598
  %v750 = vpop.f32.mrf.mxu0
  %v751 = vadd.f32 %v617, %v750
  %v752 = vpop.f32.mrf.mxu0
  %v753 = vadd.f32 %v617, %v752
  %754 = vdwg.mxu0
  %vm755 = vcmp.gt.f32.partialorder %v676, 0.0
  %vm756 = vcmp.gt.f32.partialorder %v678, 0.0
  %vm757 = vcmp.gt.f32.partialorder %v681, 0.0
  %vm758 = vcmp.gt.f32.partialorder %v683, 0.0
  %vm759 = vcmp.gt.f32.partialorder %v686, 0.0
  %vm760 = vcmp.gt.f32.partialorder %v688, 0.0
  %vm761 = vcmp.gt.f32.partialorder %v691, 0.0
  %vm762 = vcmp.gt.f32.partialorder %v693, 0.0
  %vm763 = vcmp.gt.f32.partialorder %v696, 0.0
  %vm764 = vcmp.gt.f32.partialorder %v698, 0.0
  %vm765 = vcmp.gt.f32.partialorder %v701, 0.0
  %vm766 = vcmp.gt.f32.partialorder %v703, 0.0
  %vm767 = vcmp.gt.f32.partialorder %v706, 0.0
  %vm768 = vcmp.gt.f32.partialorder %v708, 0.0
  %vm769 = vcmp.gt.f32.partialorder %v711, 0.0
  %vm770 = vcmp.gt.f32.partialorder %v713, 0.0
  %vm771 = vcmp.gt.f32.partialorder %v716, 0.0
  %vm772 = vcmp.gt.f32.partialorder %v718, 0.0
  %vm773 = vcmp.gt.f32.partialorder %v721, 0.0
  %vm774 = vcmp.gt.f32.partialorder %v723, 0.0
  %vm775 = vcmp.gt.f32.partialorder %v726, 0.0
  %vm776 = vcmp.gt.f32.partialorder %v728, 0.0
  %vm777 = vcmp.gt.f32.partialorder %v731, 0.0
  %vm778 = vcmp.gt.f32.partialorder %v733, 0.0
  %vm779 = vcmp.gt.f32.partialorder %v736, 0.0
  %vm780 = vcmp.gt.f32.partialorder %v738, 0.0
  %vm781 = vcmp.gt.f32.partialorder %v741, 0.0
  %vm782 = vcmp.gt.f32.partialorder %v743, 0.0
  %vm783 = vcmp.gt.f32.partialorder %v746, 0.0
  %vm784 = vcmp.gt.f32.partialorder %v748, 0.0
  %vm785 = vcmp.gt.f32.partialorder %v751, 0.0
  %vm786 = vcmp.gt.f32.partialorder %v753, 0.0
  %v787 = vmul.f32 %v676, 0.01
  %v788 = vmul.f32 %v678, 0.01
  %v789 = vmul.f32 %v681, 0.01
  %v790 = vmul.f32 %v683, 0.01
  %v791 = vmul.f32 %v686, 0.01
  %v792 = vmul.f32 %v688, 0.01
  %v793 = vmul.f32 %v691, 0.01
  %v794 = vmul.f32 %v693, 0.01
  %v795 = vmul.f32 %v696, 0.01
  %v796 = vmul.f32 %v698, 0.01
  %v797 = vmul.f32 %v701, 0.01
  %v798 = vmul.f32 %v703, 0.01
  %v799 = vmul.f32 %v706, 0.01
  %v800 = vmul.f32 %v708, 0.01
  %v801 = vmul.f32 %v711, 0.01
  %v802 = vmul.f32 %v713, 0.01
  %v803 = vmul.f32 %v716, 0.01
  %v804 = vmul.f32 %v718, 0.01
  %v805 = vmul.f32 %v721, 0.01
  %v806 = vmul.f32 %v723, 0.01
  %v807 = vmul.f32 %v726, 0.01
  %v808 = vmul.f32 %v728, 0.01
  %v809 = vmul.f32 %v731, 0.01
  %v810 = vmul.f32 %v733, 0.01
  %v811 = vmul.f32 %v736, 0.01
  %v812 = vmul.f32 %v738, 0.01
  %v813 = vmul.f32 %v741, 0.01
  %v814 = vmul.f32 %v743, 0.01
  %v815 = vmul.f32 %v746, 0.01
  %v816 = vmul.f32 %v748, 0.01
  %v817 = vmul.f32 %v751, 0.01
  %v818 = vmul.f32 %v753, 0.01
  %v819 = vsel %vm755, %v676, %v787
  %v820 = vsel %vm756, %v678, %v788
  %v821 = vsel %vm757, %v681, %v789
  %v822 = vsel %vm758, %v683, %v790
  %v823 = vsel %vm759, %v686, %v791
  %v824 = vsel %vm760, %v688, %v792
  %v825 = vsel %vm761, %v691, %v793
  %v826 = vsel %vm762, %v693, %v794
  %v827 = vsel %vm763, %v696, %v795
  %v828 = vsel %vm764, %v698, %v796
  %v829 = vsel %vm765, %v701, %v797
  %v830 = vsel %vm766, %v703, %v798
  %v831 = vsel %vm767, %v706, %v799
  %v832 = vsel %vm768, %v708, %v800
  %v833 = vsel %vm769, %v711, %v801
  %v834 = vsel %vm770, %v713, %v802
  %v835 = vsel %vm771, %v716, %v803
  %v836 = vsel %vm772, %v718, %v804
  %v837 = vsel %vm773, %v721, %v805
  %v838 = vsel %vm774, %v723, %v806
  %v839 = vsel %vm775, %v726, %v807
  %v840 = vsel %vm776, %v728, %v808
  %v841 = vsel %vm777, %v731, %v809
  %v842 = vsel %vm778, %v733, %v810
  %v843 = vsel %vm779, %v736, %v811
  %v844 = vsel %vm780, %v738, %v812
  %v845 = vsel %vm781, %v741, %v813
  %v846 = vsel %vm782, %v743, %v814
  %v847 = vsel %vm783, %v746, %v815
  %v848 = vsel %vm784, %v748, %v816
  %v849 = vsel %vm785, %v751, %v817
  %v850 = vsel %vm786, %v753, %v818
  %v851 = vpack.c.bf16 %v820, %v819
  %v852 = vpack.c.bf16 %v822, %v821
  %v853 = vpack.c.bf16 %v824, %v823
  %v854 = vpack.c.bf16 %v826, %v825
  %v855 = vpack.c.bf16 %v828, %v827
  %v856 = vpack.c.bf16 %v830, %v829
  %v857 = vpack.c.bf16 %v832, %v831
  %v858 = vpack.c.bf16 %v834, %v833
  %v859 = vpack.c.bf16 %v836, %v835
  %v860 = vpack.c.bf16 %v838, %v837
  %v861 = vpack.c.bf16 %v840, %v839
  %v862 = vpack.c.bf16 %v842, %v841
  %v863 = vpack.c.bf16 %v844, %v843
  %v864 = vpack.c.bf16 %v846, %v845
  %v865 = vpack.c.bf16 %v848, %v847
  %v866 = vpack.c.bf16 %v850, %v849
  %v867 = vld [vmem:[%s4] sm:$0xf]
  %v868 = vld [vmem:[%s4 + $0x4] sm:$0xf]
  %v869 = vld [vmem:[%s4 + $0x8] sm:$0xf]
  %v870 = vld [vmem:[%s4 + $0xc] sm:$0xf]
  %v871 = vld [vmem:[%s4 + $0x10] sm:$0xf]
  %v872 = vld [vmem:[%s4 + $0x14] sm:$0xf]
  %v873 = vld [vmem:[%s4 + $0x18] sm:$0xf]
  %v874 = vld [vmem:[%s4 + $0x1c] sm:$0xf]
  %v875 = vld [vmem:[%s4 + $0x20] sm:$0xf]
  %v876 = vld [vmem:[%s4 + $0x24] sm:$0xf]
  %v877 = vld [vmem:[%s4 + $0x28] sm:$0xf]
  %v878 = vld [vmem:[%s4 + $0x2c] sm:$0xf]
  %v879 = vld [vmem:[%s4 + $0x30] sm:$0xf]
  %v880 = vld [vmem:[%s4 + $0x34] sm:$0xf]
  %v881 = vld [vmem:[%s4 + $0x38] sm:$0xf]
  %v882 = vld [vmem:[%s4 + $0x3c] sm:$0xf]
  %v883 = vld [vmem:[%s5] sm:$0x1]
  %v885 = vperm.slane %v883, 0
  %v903 = vunpack.c.l.b16 %v867
  %v904 = vunpack.c.l.b16 %v868
  %v905 = vunpack.c.l.b16 %v869
  %v906 = vunpack.c.l.b16 %v870
  %v907 = vunpack.c.l.b16 %v871
  %v908 = vunpack.c.l.b16 %v872
  %v909 = vunpack.c.l.b16 %v873
  %v910 = vunpack.c.l.b16 %v874
  %v911 = vunpack.c.l.b16 %v875
  %v912 = vunpack.c.l.b16 %v876
  %v913 = vunpack.c.l.b16 %v877
  %v914 = vunpack.c.l.b16 %v878
  %v915 = vunpack.c.l.b16 %v879
  %v916 = vunpack.c.l.b16 %v880
  %v917 = vunpack.c.l.b16 %v881
  %v918 = vunpack.c.l.b16 %v882
  %v919 = vpack.c.b16 %v904, %v903
  %v920 = vpack.c.b16 %v906, %v905
  %v921 = vpack.c.b16 %v908, %v907
  %v922 = vpack.c.b16 %v910, %v909
  %v923 = vpack.c.b16 %v912, %v911
  %v924 = vpack.c.b16 %v914, %v913
  %v925 = vpack.c.b16 %v916, %v915
  %v926 = vpack.c.b16 %v918, %v917
  %935 = vmatpush.bf16.msra.mxu0 %v926
  %936 = vmatpush.bf16.msra.mxu0 %v925
  %937 = vmatpush.bf16.msra.mxu0 %v924
  %938 = vmatpush.bf16.msra.mxu0 %v923
  %939 = vmatpush.bf16.msra.mxu0 %v922
  %940 = vmatpush.bf16.msra.mxu0 %v921
  %941 = vmatpush.bf16.msra.mxu0 %v920
  %942 = vmatpush.bf16.msra.mxu0 %v919
  %943 = vmatmul.bf16.gmra.mxu0 %v851
  %v944 = vpop.f32.mrf.mxu0
  %v945 = vadd.f32 %v885, %v944
  %v946 = vpop.f32.mrf.mxu0
  %v947 = vadd.f32 %v885, %v946
  %948 = vmatmul.bf16.gmra.mxu0 %v852
  %v949 = vpop.f32.mrf.mxu0
  %v950 = vadd.f32 %v885, %v949
  %v951 = vpop.f32.mrf.mxu0
  %v952 = vadd.f32 %v885, %v951
  %953 = vmatmul.bf16.gmra.mxu0 %v853
  %v954 = vpop.f32.mrf.mxu0
  %v955 = vadd.f32 %v885, %v954
  %v956 = vpop.f32.mrf.mxu0
  %v957 = vadd.f32 %v885, %v956
  %958 = vmatmul.bf16.gmra.mxu0 %v854
  %v959 = vpop.f32.mrf.mxu0
  %v960 = vadd.f32 %v885, %v959
  %v961 = vpop.f32.mrf.mxu0
  %v962 = vadd.f32 %v885, %v961
  %963 = vmatmul.bf16.gmra.mxu0 %v855
  %v964 = vpop.f32.mrf.mxu0
  %v965 = vadd.f32 %v885, %v964
  %v966 = vpop.f32.mrf.mxu0
  %v967 = vadd.f32 %v885, %v966
  %968 = vmatmul.bf16.gmra.mxu0 %v856
  %v969 = vpop.f32.mrf.mxu0
  %v970 = vadd.f32 %v885, %v969
  %v971 = vpop.f32.mrf.mxu0
  %v972 = vadd.f32 %v885, %v971
  %973 = vmatmul.bf16.gmra.mxu0 %v857
  %v974 = vpop.f32.mrf.mxu0
  %v975 = vadd.f32 %v885, %v974
  %v976 = vpop.f32.mrf.mxu0
  %v977 = vadd.f32 %v885, %v976
  %978 = vmatmul.bf16.gmra.mxu0 %v858
  %v979 = vpop.f32.mrf.mxu0
  %v980 = vadd.f32 %v885, %v979
  %v981 = vpop.f32.mrf.mxu0
  %v982 = vadd.f32 %v885, %v981
  %983 = vmatmul.bf16.gmra.mxu0 %v859
  %v984 = vpop.f32.mrf.mxu0
  %v985 = vadd.f32 %v885, %v984
  %v986 = vpop.f32.mrf.mxu0
  %v987 = vadd.f32 %v885, %v986
  %988 = vmatmul.bf16.gmra.mxu0 %v860
  %v989 = vpop.f32.mrf.mxu0
  %v990 = vadd.f32 %v885, %v989
  %v991 = vpop.f32.mrf.mxu0
  %v992 = vadd.f32 %v885, %v991
  %993 = vmatmul.bf16.gmra.mxu0 %v861
  %v994 = vpop.f32.mrf.mxu0
  %v995 = vadd.f32 %v885, %v994
  %v996 = vpop.f32.mrf.mxu0
  %v997 = vadd.f32 %v885, %v996
  %998 = vmatmul.bf16.gmra.mxu0 %v862
  %v999 = vpop.f32.mrf.mxu0
  %v1000 = vadd.f32 %v885, %v999
  %v1001 = vpop.f32.mrf.mxu0
  %v1002 = vadd.f32 %v885, %v1001
  %1003 = vmatmul.bf16.gmra.mxu0 %v863
  %v1004 = vpop.f32.mrf.mxu0
  %v1005 = vadd.f32 %v885, %v1004
  %v1006 = vpop.f32.mrf.mxu0
  %v1007 = vadd.f32 %v885, %v1006
  %1008 = vmatmul.bf16.gmra.mxu0 %v864
  %v1009 = vpop.f32.mrf.mxu0
  %v1010 = vadd.f32 %v885, %v1009
  %v1011 = vpop.f32.mrf.mxu0
  %v1012 = vadd.f32 %v885, %v1011
  %1013 = vmatmul.bf16.gmra.mxu0 %v865
  %v1014 = vpop.f32.mrf.mxu0
  %v1015 = vadd.f32 %v885, %v1014
  %v1016 = vpop.f32.mrf.mxu0
  %v1017 = vadd.f32 %v885, %v1016
  %1018 = vmatmul.bf16.gmra.mxu0 %v866
  %v1019 = vpop.f32.mrf.mxu0
  %v1020 = vadd.f32 %v885, %v1019
  %v1021 = vpop.f32.mrf.mxu0
  %v1022 = vadd.f32 %v885, %v1021
  %1023 = vdwg.mxu0
  %v1024 = vsub.f32 0.0, %v945
  %v1025 = vsub.f32 0.0, %v947
  %v1026 = vsub.f32 0.0, %v950
  %v1027 = vsub.f32 0.0, %v952
  %v1028 = vsub.f32 0.0, %v955
  %v1029 = vsub.f32 0.0, %v957
  %v1030 = vsub.f32 0.0, %v960
  %v1031 = vsub.f32 0.0, %v962
  %v1032 = vsub.f32 0.0, %v965
  %v1033 = vsub.f32 0.0, %v967
  %v1034 = vsub.f32 0.0, %v970
  %v1035 = vsub.f32 0.0, %v972
  %v1036 = vsub.f32 0.0, %v975
  %v1037 = vsub.f32 0.0, %v977
  %v1038 = vsub.f32 0.0, %v980
  %v1039 = vsub.f32 0.0, %v982
  %v1040 = vsub.f32 0.0, %v985
  %v1041 = vsub.f32 0.0, %v987
  %v1042 = vsub.f32 0.0, %v990
  %v1043 = vsub.f32 0.0, %v992
  %v1044 = vsub.f32 0.0, %v995
  %v1045 = vsub.f32 0.0, %v997
  %v1046 = vsub.f32 0.0, %v1000
  %v1047 = vsub.f32 0.0, %v1002
  %v1048 = vsub.f32 0.0, %v1005
  %v1049 = vsub.f32 0.0, %v1007
  %v1050 = vsub.f32 0.0, %v1010
  %v1051 = vsub.f32 0.0, %v1012
  %v1052 = vsub.f32 0.0, %v1015
  %v1053 = vsub.f32 0.0, %v1017
  %v1054 = vsub.f32 0.0, %v1020
  %v1055 = vsub.f32 0.0, %v1022
  %v1056 = vmul.f32 %v1024, 1.442695
  %v1057 = vpow.pop %v1056
  %v1058 = vmul.f32 %v1025, 1.442695
  %v1059 = vpow.pop %v1058
  %v1060 = vmul.f32 %v1026, 1.442695
  %v1061 = vpow.pop %v1060
  %v1062 = vmul.f32 %v1027, 1.442695
  %v1063 = vpow.pop %v1062
  %v1064 = vmul.f32 %v1028, 1.442695
  %v1065 = vpow.pop %v1064
  %v1066 = vmul.f32 %v1029, 1.442695
  %v1067 = vpow.pop %v1066
  %v1068 = vmul.f32 %v1030, 1.442695
  %v1069 = vpow.pop %v1068
  %v1070 = vmul.f32 %v1031, 1.442695
  %v1071 = vpow.pop %v1070
  %v1072 = vmul.f32 %v1032, 1.442695
  %v1073 = vpow.pop %v1072
  %v1074 = vmul.f32 %v1033, 1.442695
  %v1075 = vpow.pop %v1074
  %v1076 = vmul.f32 %v1034, 1.442695
  %v1077 = vpow.pop %v1076
  %v1078 = vmul.f32 %v1035, 1.442695
  %v1079 = vpow.pop %v1078
  %v1080 = vmul.f32 %v1036, 1.442695
  %v1081 = vpow.pop %v1080
  %v1082 = vmul.f32 %v1037, 1.442695
  %v1083 = vpow.pop %v1082
  %v1084 = vmul.f32 %v1038, 1.442695
  %v1085 = vpow.pop %v1084
  %v1086 = vmul.f32 %v1039, 1.442695
  %v1087 = vpow.pop %v1086
  %v1088 = vmul.f32 %v1040, 1.442695
  %v1089 = vpow.pop %v1088
  %v1090 = vmul.f32 %v1041, 1.442695
  %v1091 = vpow.pop %v1090
  %v1092 = vmul.f32 %v1042, 1.442695
  %v1093 = vpow.pop %v1092
  %v1094 = vmul.f32 %v1043, 1.442695
  %v1095 = vpow.pop %v1094
  %v1096 = vmul.f32 %v1044, 1.442695
  %v1097 = vpow.pop %v1096
  %v1098 = vmul.f32 %v1045, 1.442695
  %v1099 = vpow.pop %v1098
  %v1100 = vmul.f32 %v1046, 1.442695
  %v1101 = vpow.pop %v1100
  %v1102 = vmul.f32 %v1047, 1.442695
  %v1103 = vpow.pop %v1102
  %v1104 = vmul.f32 %v1048, 1.442695
  %v1105 = vpow.pop %v1104
  %v1106 = vmul.f32 %v1049, 1.442695
  %v1107 = vpow.pop %v1106
  %v1108 = vmul.f32 %v1050, 1.442695
  %v1109 = vpow.pop %v1108
  %v1110 = vmul.f32 %v1051, 1.442695
  %v1111 = vpow.pop %v1110
  %v1112 = vmul.f32 %v1052, 1.442695
  %v1113 = vpow.pop %v1112
  %v1114 = vmul.f32 %v1053, 1.442695
  %v1115 = vpow.pop %v1114
  %v1116 = vmul.f32 %v1054, 1.442695
  %v1117 = vpow.pop %v1116
  %v1118 = vmul.f32 %v1055, 1.442695
  %v1119 = vpow.pop %v1118
  %v1120 = vadd.f32 %v1057, 1.0
  %v1121 = vadd.f32 %v1059, 1.0
  %v1122 = vadd.f32 %v1061, 1.0
  %v1123 = vadd.f32 %v1063, 1.0
  %v1124 = vadd.f32 %v1065, 1.0
  %v1125 = vadd.f32 %v1067, 1.0
  %v1126 = vadd.f32 %v1069, 1.0
  %v1127 = vadd.f32 %v1071, 1.0
  %v1128 = vadd.f32 %v1073, 1.0
  %v1129 = vadd.f32 %v1075, 1.0
  %v1130 = vadd.f32 %v1077, 1.0
  %v1131 = vadd.f32 %v1079, 1.0
  %v1132 = vadd.f32 %v1081, 1.0
  %v1133 = vadd.f32 %v1083, 1.0
  %v1134 = vadd.f32 %v1085, 1.0
  %v1135 = vadd.f32 %v1087, 1.0
  %v1136 = vadd.f32 %v1089, 1.0
  %v1137 = vadd.f32 %v1091, 1.0
  %v1138 = vadd.f32 %v1093, 1.0
  %v1139 = vadd.f32 %v1095, 1.0
  %v1140 = vadd.f32 %v1097, 1.0
  %v1141 = vadd.f32 %v1099, 1.0
  %v1142 = vadd.f32 %v1101, 1.0
  %v1143 = vadd.f32 %v1103, 1.0
  %v1144 = vadd.f32 %v1105, 1.0
  %v1145 = vadd.f32 %v1107, 1.0
  %v1146 = vadd.f32 %v1109, 1.0
  %v1147 = vadd.f32 %v1111, 1.0
  %v1148 = vadd.f32 %v1113, 1.0
  %v1149 = vadd.f32 %v1115, 1.0
  %v1150 = vadd.f32 %v1117, 1.0
  %v1151 = vadd.f32 %v1119, 1.0
  %v1152 = vrcp.pop %v1120
  %v1153 = vrcp.pop %v1121
  %v1154 = vrcp.pop %v1122
  %v1155 = vrcp.pop %v1123
  %v1156 = vrcp.pop %v1124
  %v1157 = vrcp.pop %v1125
  %v1158 = vrcp.pop %v1126
  %v1159 = vrcp.pop %v1127
  %v1160 = vrcp.pop %v1128
  %v1161 = vrcp.pop %v1129
  %v1162 = vrcp.pop %v1130
  %v1163 = vrcp.pop %v1131
  %v1164 = vrcp.pop %v1132
  %v1165 = vrcp.pop %v1133
  %v1166 = vrcp.pop %v1134
  %v1167 = vrcp.pop %v1135
  %v1168 = vrcp.pop %v1136
  %v1169 = vrcp.pop %v1137
  %v1170 = vrcp.pop %v1138
  %v1171 = vrcp.pop %v1139
  %v1172 = vrcp.pop %v1140
  %v1173 = vrcp.pop %v1141
  %v1174 = vrcp.pop %v1142
  %v1175 = vrcp.pop %v1143
  %v1176 = vrcp.pop %v1144
  %v1177 = vrcp.pop %v1145
  %v1178 = vrcp.pop %v1146
  %v1179 = vrcp.pop %v1147
  %v1180 = vrcp.pop %v1148
  %v1181 = vrcp.pop %v1149
  %v1182 = vrcp.pop %v1150
  %v1183 = vrcp.pop %v1151
  %vm1184 = vcmask 64512
  %1185 = vst.msk [vmem:[%s6] sm:$0xff] %vm1184, %v1152
  %1186 = vst.msk [vmem:[%s6 + $0x8] sm:$0xff] %vm1184, %v1153
  %1187 = vst.msk [vmem:[%s6 + $0x10] sm:$0xff] %vm1184, %v1154
  %1188 = vst.msk [vmem:[%s6 + $0x18] sm:$0xff] %vm1184, %v1155
  %1189 = vst.msk [vmem:[%s6 + $0x20] sm:$0xff] %vm1184, %v1156
  %1190 = vst.msk [vmem:[%s6 + $0x28] sm:$0xff] %vm1184, %v1157
  %1191 = vst.msk [vmem:[%s6 + $0x30] sm:$0xff] %vm1184, %v1158
  %1192 = vst.msk [vmem:[%s6 + $0x38] sm:$0xff] %vm1184, %v1159
  %1193 = vst.msk [vmem:[%s6 + $0x40] sm:$0xff] %vm1184, %v1160
  %1194 = vst.msk [vmem:[%s6 + $0x48] sm:$0xff] %vm1184, %v1161
  %1195 = vst.msk [vmem:[%s6 + $0x50] sm:$0xff] %vm1184, %v1162
  %1196 = vst.msk [vmem:[%s6 + $0x58] sm:$0xff] %vm1184, %v1163
  %1197 = vst.msk [vmem:[%s6 + $0x60] sm:$0xff] %vm1184, %v1164
  %1198 = vst.msk [vmem:[%s6 + $0x68] sm:$0xff] %vm1184, %v1165
  %1199 = vst.msk [vmem:[%s6 + $0x70] sm:$0xff] %vm1184, %v1166
  %1200 = vst.msk [vmem:[%s6 + $0x78] sm:$0xff] %vm1184, %v1167
  %1201 = vst.msk [vmem:[%s6 + $0x80] sm:$0xff] %vm1184, %v1168
  %1202 = vst.msk [vmem:[%s6 + $0x88] sm:$0xff] %vm1184, %v1169
  %1203 = vst.msk [vmem:[%s6 + $0x90] sm:$0xff] %vm1184, %v1170
  %1204 = vst.msk [vmem:[%s6 + $0x98] sm:$0xff] %vm1184, %v1171
  %1205 = vst.msk [vmem:[%s6 + $0xa0] sm:$0xff] %vm1184, %v1172
  %1206 = vst.msk [vmem:[%s6 + $0xa8] sm:$0xff] %vm1184, %v1173
  %1207 = vst.msk [vmem:[%s6 + $0xb0] sm:$0xff] %vm1184, %v1174
  %1208 = vst.msk [vmem:[%s6 + $0xb8] sm:$0xff] %vm1184, %v1175
  %1209 = vst.msk [vmem:[%s6 + $0xc0] sm:$0xff] %vm1184, %v1176
  %1210 = vst.msk [vmem:[%s6 + $0xc8] sm:$0xff] %vm1184, %v1177
  %1211 = vst.msk [vmem:[%s6 + $0xd0] sm:$0xff] %vm1184, %v1178
  %1212 = vst.msk [vmem:[%s6 + $0xd8] sm:$0xff] %vm1184, %v1179
  %1213 = vst.msk [vmem:[%s6 + $0xe0] sm:$0xff] %vm1184, %v1180
  %1214 = vst.msk [vmem:[%s6 + $0xe8] sm:$0xff] %vm1184, %v1181
  %1215 = vst.msk [vmem:[%s6 + $0xf0] sm:$0xff] %vm1184, %v1182
  %1216 = vst.msk [vmem:[%s6 + $0xf8] sm:$0xff] %vm1184, %v1183
  // Predicated region
  $region26: #{tpu_custom_call.1} parent=0 // pred_check
    _
  $region27: #{tpu_custom_call.1} parent=0 // pred_check_branch
    %1218 = sbr.rel (0) target = $region29
  $region28: #{tpu_custom_call.1} parent=0 // pred_region
    _
  $region29: #{tpu_custom_call.1} parent=0 // pred_fallthru
    _
  // Predicated region
  $region30: #{tpu_custom_call.1} parent=0 // pred_check
    _
  $region31: #{tpu_custom_call.1} parent=0 // pred_check_branch
    %1220 = sbr.rel (0) target = $region33
  $region32: #{tpu_custom_call.1} parent=0 // pred_region
    _
  $region33: #{tpu_custom_call.1} parent=0 // pred_fallthru
    _

</llo_original>
